<compile_context>
chip_gen: v7x
topology: tpu7x:2x2x1
jax: 0.10.0
libtpu: 0.0.40
codegen_flags: <defaults>
</compile_context>

<pallas_src>
import functools
import math

import jax
import jax.numpy as jnp
from jax.experimental import pallas as pl
from jax.experimental.pallas import tpu as pltpu


# ---------------------------------------------------------------------------
# Hardware queries (best effort; safe fallbacks).
# ---------------------------------------------------------------------------
def _tensorcores_per_device():
    """2 for megacore-style chips (v4 / v5p / v7x), else 1 (v5e / v6e)."""
    try:
        kind = jax.devices()[0].device_kind.lower()
    except Exception:
        return 1
    if any(tag in kind for tag in ("v4", "v5p", "7x", "v7")):
        return 2
    return 1


def _vmem_capacity_bytes():
    try:
        info = pltpu.get_tpu_info()
        for name in ("vmem_capacity_bytes", "vmem_size_bytes", "vmem_bytes"):
            val = getattr(info, name, None)
            if val:
                return int(val)
    except Exception:
        pass
    return 64 * 1024 * 1024     # conservative (v7x-sized) default


def _footprint_bytes(tb, S, E, H, in_bytes, out_bytes):
    """Rough per-grid-step VMEM working set for tile-size selection."""
    M = tb * S
    io = 2 * M * E * (in_bytes + out_bytes)                # double-buffered x / out
    weights = 2 * (3 * E * E + E * E) * in_bytes + 2 * 4 * E * 4
    qkv = M * 3 * E * (4 + in_bytes)                       # f32 accum + cast copy
    attn = 2 * tb * S * S * 4                              # scores + probs (per head)
    ctx = M * E * (in_bytes + 4)                           # ctx scratch + f32 values
    return io + weights + qkv + attn + ctx


# ---------------------------------------------------------------------------
# Kernel
# ---------------------------------------------------------------------------
def _mha_kernel(x_ref, wqkv_ref, bqkv_ref, wo_ref, bo_ref, out_ref, ctx_ref, *,
                tb, seq, num_heads, depth, approx_recip):
    # x_ref   : (tb*S, E)   matmul_dtype
    # wqkv_ref: (E, 3E)     matmul_dtype (scale already folded into the Q third)
    # bqkv_ref: (1, 3E)     f32
    # wo_ref  : (E, E)      matmul_dtype
    # bo_ref  : (1, E)      f32
    # out_ref : (tb*S, E)   x.dtype
    # ctx_ref : (tb*S, E)   matmul_dtype VMEM scratch
    H, D, S = num_heads, depth, seq
    E = H * D
    M = tb * S
    mm_dtype = wqkv_ref.dtype

    # Fused Q/K/V projection: ONE (M, E) @ (E, 3E) MXU matmul, f32 accumulation.
    qkv = jnp.dot(x_ref[...], wqkv_ref[...], preferred_element_type=jnp.float32)
    qkv = (qkv + bqkv_ref[...]).astype(mm_dtype)     # single cast of the whole tensor
    qkv = qkv.reshape(tb, S, 3 * E)                  # leading-dim split (free)

    # Per-head scaled-dot-product attention (scale already folded into Q).
    for h in range(H):                               # small static loop
        lo = h * D
        qh = qkv[:, :, lo:lo + D]                    # (tb, S, D)
        kh = qkv[:, :, E + lo:E + lo + D]            # (tb, S, D)
        vh = qkv[:, :, 2 * E + lo:2 * E + lo + D]    # (tb, S, D)

        s = jnp.einsum("bqd,bkd->bqk", qh, kh,
                       preferred_element_type=jnp.float32)          # (tb, S, S)
        s = s - jnp.max(s, axis=-1, keepdims=True)
        p = jnp.exp(s)
        attn = p * pl.reciprocal(jnp.sum(p, axis=-1, keepdims=True),
                                 approx=approx_recip)
        ctx = jnp.einsum("bqk,bkd->bqd", attn.astype(mm_dtype), vh,
                         preferred_element_type=jnp.float32)         # (tb, S, D)

        # Place this head's context into its lane range of the (M, E) scratch.
        ctx_ref[:, lo:lo + D] = ctx.reshape(M, D).astype(ctx_ref.dtype)

    # ONE full-E output projection: (M, E) @ (E, E) with f32 accumulation.
    y = jnp.dot(ctx_ref[...], wo_ref[...], preferred_element_type=jnp.float32)
    out_ref[...] = (y + bo_ref[...]).astype(out_ref.dtype)


# ---------------------------------------------------------------------------
# Host-side wrappers
# ---------------------------------------------------------------------------
def fuse_mha_params(params, num_heads, matmul_dtype=jnp.bfloat16):
    """Build the fused QKV weight/bias once (outside the per-call hot path)."""
    E = params["wq"].shape[0]
    assert E % num_heads == 0
    depth = E // num_heads
    scale = 1.0 / math.sqrt(depth)
    wqkv = jnp.concatenate(
        [params["wq"] * scale, params["wk"], params["wv"]], axis=1)   # (E, 3E)
    bqkv = jnp.concatenate(
        [params["bq"] * scale, params["bk"], params["bv"]], axis=1)   # (1, 3E)
    return {
        "wqkv": wqkv.astype(matmul_dtype),
        "bqkv": bqkv.astype(jnp.float32),
        "wo": params["wo"].astype(matmul_dtype),
        "bo": params["bo"].astype(jnp.float32),
    }


def multi_head_attention(x, fused, num_heads, *, batch_tile=32):
    """x: [B, S, E] -> [B, S, E]; matches MultiHeadAttention.forward (no smolgen)."""
    B, S, E = x.shape
    assert E % num_heads == 0
    depth = E // num_heads
    mm_dtype = fused["wqkv"].dtype
    in_bytes = jnp.dtype(mm_dtype).itemsize
    out_bytes = jnp.dtype(x.dtype).itemsize

    # ----- generation-aware batch-tile selection -----
    ntc = _tensorcores_per_device()
    vmem_cap = _vmem_capacity_bytes()

    tb = max(1, min(batch_tile, B))
    if ntc > 1 and B >= ntc:
        tb = max(1, min(tb, pl.cdiv(B, ntc)))        # >=2 grid steps for 2-TC chips

    budget = int(vmem_cap * 0.45)                    # headroom for double-buffering
    while tb > 1 and _footprint_bytes(tb, S, E, num_heads, in_bytes, out_bytes) > budget:
        tb = max(1, tb // 2)

    # Prefer a tile that divides B (avoid a padded copy) if it costs < 2x.
    d = tb
    while B % d:
        d -= 1
    if d * 2 >= tb:
        tb = d
    Bp = pl.cdiv(B, tb) * tb

    # ----- host-side layout: (B, S, E) -> (B*S, E), cast MXU operands -----
    x_m = x.astype(mm_dtype)
    if Bp != B:
        x_m = jnp.pad(x_m, ((0, Bp - B), (0, 0), (0, 0)))   # zero pad: softmax stays finite
    x2 = x_m.reshape(Bp * S, E)

    approx_recip = jnp.dtype(mm_dtype) != jnp.dtype(jnp.float32)
    kernel = functools.partial(_mha_kernel, tb=tb, seq=S, num_heads=num_heads,
                               depth=depth, approx_recip=bool(approx_recip))

    fp = _footprint_bytes(tb, S, E, num_heads, in_bytes, out_bytes)
    vmem_limit = int(min(vmem_cap * 0.9, max(32 * 1024 * 1024, 1.5 * fp)))

    out2 = pl.pallas_call(
        kernel,
        out_shape=jax.ShapeDtypeStruct((Bp * S, E), x.dtype),
        grid_spec=pltpu.PrefetchScalarGridSpec(
            num_scalar_prefetch=0,
            grid=(Bp // tb,),
            in_specs=[
                pl.BlockSpec((tb * S, E), lambda b: (b, 0)),      # x rows (batch-tiled)
                pl.BlockSpec((E, 3 * E), lambda b: (0, 0)),       # fused Wqkv
                pl.BlockSpec((1, 3 * E), lambda b: (0, 0)),       # fused bqkv
                pl.BlockSpec((E, E), lambda b: (0, 0)),           # Wo
                pl.BlockSpec((1, E), lambda b: (0, 0)),           # bo
            ],
            out_specs=pl.BlockSpec((tb * S, E), lambda b: (b, 0)),
            scratch_shapes=[pltpu.VMEM((tb * S, E), mm_dtype)],   # per-head ctx assembly
        ),
        compiler_params=pltpu.CompilerParams(
            dimension_semantics=("parallel",),
            vmem_limit_bytes=vmem_limit),
    )(x2, fused["wqkv"], fused["bqkv"], fused["wo"], fused["bo"])

    return out2.reshape(Bp, S, E)[:B]


# ---------------------------------------------------------------------------
# Pure-JAX reference (matches the PyTorch forward exactly) + init + test
# ---------------------------------------------------------------------------
def _reference(x, params, num_heads):
    B, S, E = x.shape
    depth = E // num_heads
    hi = jax.lax.Precision.HIGHEST
    q = jnp.einsum("bse,ef->bsf", x, params["wq"], precision=hi) + params["bq"]
    k = jnp.einsum("bse,ef->bsf", x, params["wk"], precision=hi) + params["bk"]
    v = jnp.einsum("bse,ef->bsf", x, params["wv"], precision=hi) + params["bv"]
    q = q.reshape(B, S, num_heads, depth).transpose(0, 2, 1, 3)
    k = k.reshape(B, S, num_heads, depth).transpose(0, 2, 1, 3)
    v = v.reshape(B, S, num_heads, depth).transpose(0, 2, 1, 3)
    scores = jnp.einsum("bhqd,bhkd->bhqk", q, k, precision=hi) / math.sqrt(depth)
    attn = jax.nn.softmax(scores, axis=-1)
    ctx = jnp.einsum("bhqk,bhkd->bhqd", attn, v, precision=hi)
    ctx = ctx.transpose(0, 2, 1, 3).reshape(B, S, E)
    return jnp.einsum("bse,ef->bsf", ctx, params["wo"], precision=hi) + params["bo"]


def _init_params(key, embedding_size):
    """PyTorch nn.Linear-style init; weights stored as (in, out)."""
    ks = jax.random.split(key, 8)

    def lin(kw, kb, fan_in, fan_out):
        bound = 1.0 / math.sqrt(fan_in)
        w = jax.random.uniform(kw, (fan_in, fan_out), jnp.float32, -bound, bound)
        b = jax.random.uniform(kb, (1, fan_out), jnp.float32, -bound, bound)
        return w, b

    wq, bq = lin(ks[0], ks[1], embedding_size, embedding_size)
    wk, bk = lin(ks[2], ks[3], embedding_size, embedding_size)
    wv, bv = lin(ks[4], ks[5], embedding_size, embedding_size)
    wo, bo = lin(ks[6], ks[7], embedding_size, embedding_size)
    return {"wq": wq, "bq": bq, "wk": wk, "bk": bk,
            "wv": wv, "bv": bv, "wo": wo, "bo": bo}


if __name__ == "__main__":
    # Small, module-consistent shapes.
    batch = 2
    seq = 16
    embedding_size = 128
    num_heads = 4

    key = jax.random.PRNGKey(0)
    kx, kp = jax.random.split(key)
    x = jax.random.normal(kx, (batch, seq, embedding_size), dtype=jnp.float32)
    params = _init_params(kp, embedding_size)
    ref = _reference(x, params, num_heads)

    # f32 MXU operands: tighter numerical check.
    fused_f32 = fuse_mha_params(params, num_heads, matmul_dtype=jnp.float32)
    out_f32 = jax.block_until_ready(multi_head_attention(x, fused_f32, num_heads))
    assert out_f32.shape == (batch, seq, embedding_size)
    assert jnp.allclose(out_f32, ref, atol=1e-2, rtol=1e-2), "f32 path mismatch vs reference"

    # Default bf16 MXU operands (fast path), f32 accumulation -> looser tolerance.
    fused_bf16 = fuse_mha_params(params, num_heads)
    out_bf16 = jax.block_until_ready(multi_head_attention(x, fused_bf16, num_heads))
    assert out_bf16.shape == (batch, seq, embedding_size)
    assert jnp.allclose(out_bf16, ref, atol=5e-2, rtol=5e-2), "bf16 path mismatch vs reference"

    print("KERNEL_OK")
</pallas_src>

<mosaic_0001>
module attributes {stable_mosaic.version = 11 : i64} {
  func.func @_mha_kernel(%arg0: i32, %arg1: memref<32x128xf32, #tpu.memory_space<vmem>>, %arg2: memref<128x384xf32, #tpu.memory_space<vmem>>, %arg3: memref<1x384xf32, #tpu.memory_space<vmem>>, %arg4: memref<128x128xf32, #tpu.memory_space<vmem>>, %arg5: memref<1x128xf32, #tpu.memory_space<vmem>>, %arg6: memref<32x128xf32, #tpu.memory_space<vmem>>, %arg7: memref<32x128xf32, #tpu.memory_space<vmem>>) attributes {dimension_semantics = [#tpu.dimension_semantics<parallel>], iteration_bounds = array<i64: 1>, scalar_prefetch = 0 : i64, scratch_operands = 1 : i64, tpu.core_type = #tpu.core_type<tc>, window_params = [{transform_indices = @transform_0, window_bounds = array<i64: 32, 128>}, {pipeline_mode = #tpu.pipeline_mode<synchronous>, transform_indices = @transform_1, window_bounds = array<i64: 128, 384>}, {pipeline_mode = #tpu.pipeline_mode<synchronous>, transform_indices = @transform_2, window_bounds = array<i64: 1, 384>}, {pipeline_mode = #tpu.pipeline_mode<synchronous>, transform_indices = @transform_3, window_bounds = array<i64: 128, 128>}, {pipeline_mode = #tpu.pipeline_mode<synchronous>, transform_indices = @transform_4, window_bounds = array<i64: 1, 128>}, {transform_indices = @transform_5, window_bounds = array<i64: 32, 128>}]} {
    %c0 = arith.constant 0 : index
    %c0_0 = arith.constant 0 : index
    %0 = vector.load %arg1[%c0, %c0_0] : memref<32x128xf32, #tpu.memory_space<vmem>>, vector<32x128xf32>
    %c0_1 = arith.constant 0 : index
    %c0_2 = arith.constant 0 : index
    %1 = vector.load %arg2[%c0_1, %c0_2] : memref<128x384xf32, #tpu.memory_space<vmem>>, vector<128x384xf32>
    %cst = arith.constant dense<0.000000e+00> : vector<32x384xf32>
    %2 = tpu.matmul %0, %1, %cst {dimension_numbers = #tpu.dot_dimension_numbers<[1], [0], [0], [1], [0, 0, 1, 1], [], []>} : vector<32x128xf32>, vector<128x384xf32>, vector<32x384xf32> -> vector<32x384xf32>
    %c0_3 = arith.constant 0 : index
    %c0_4 = arith.constant 0 : index
    %3 = vector.load %arg3[%c0_3, %c0_4] : memref<1x384xf32, #tpu.memory_space<vmem>>, vector<1x384xf32>
    %4 = vector.broadcast %3 : vector<1x384xf32> to vector<32x384xf32>
    %5 = arith.addf %2, %4 : vector<32x384xf32>
    %6 = vector.shape_cast %5 : vector<32x384xf32> to vector<2x16x384xf32>
    %7 = vector.extract_strided_slice %6 {offsets = [0, 0, 0], sizes = [2, 16, 32], strides = [1, 1, 1]} : vector<2x16x384xf32> to vector<2x16x32xf32>
    %8 = vector.extract_strided_slice %6 {offsets = [0, 0, 128], sizes = [2, 16, 32], strides = [1, 1, 1]} : vector<2x16x384xf32> to vector<2x16x32xf32>
    %9 = vector.extract_strided_slice %6 {offsets = [0, 0, 256], sizes = [2, 16, 32], strides = [1, 1, 1]} : vector<2x16x384xf32> to vector<2x16x32xf32>
    "tpu.trace_start"() <{level = 10 : i32, message = "bqd,bkd->bqk"}> : () -> ()
    %cst_5 = arith.constant dense<0.000000e+00> : vector<2x16x16xf32>
    %10 = tpu.matmul %7, %8, %cst_5 {dimension_numbers = #tpu.dot_dimension_numbers<[2], [2], [1], [1], [0, 0, 0, 1, 1, 1], [0], [0]>} : vector<2x16x32xf32>, vector<2x16x32xf32>, vector<2x16x16xf32> -> vector<2x16x16xf32>
    "tpu.trace_stop"() : () -> ()
    %cst_6 = arith.constant dense<0xFF800000> : vector<2x16xf32>
    %11 = vector.multi_reduction <maximumf>, %10, %cst_6 [2] : vector<2x16x16xf32> to vector<2x16xf32>
    %12 = vector.shape_cast %11 : vector<2x16xf32> to vector<2x16x1xf32>
    %13 = vector.broadcast %12 : vector<2x16x1xf32> to vector<2x16x16xf32>
    %14 = arith.subf %10, %13 : vector<2x16x16xf32>
    %15 = math.exp %14 : vector<2x16x16xf32>
    %cst_7 = arith.constant dense<0.000000e+00> : vector<2x16xf32>
    %16 = vector.multi_reduction <add>, %15, %cst_7 [2] : vector<2x16x16xf32> to vector<2x16xf32>
    %17 = vector.shape_cast %16 : vector<2x16xf32> to vector<2x16x1xf32>
    %18 = tpu.reciprocal %17 : vector<2x16x1xf32> -> vector<2x16x1xf32>
    %19 = vector.broadcast %18 : vector<2x16x1xf32> to vector<2x16x16xf32>
    %20 = arith.mulf %15, %19 : vector<2x16x16xf32>
    "tpu.trace_start"() <{level = 10 : i32, message = "bqk,bkd->bqd"}> : () -> ()
    %cst_8 = arith.constant dense<0.000000e+00> : vector<2x16x32xf32>
    %21 = tpu.matmul %20, %9, %cst_8 {dimension_numbers = #tpu.dot_dimension_numbers<[2], [1], [1], [2], [0, 0, 0, 1, 1, 2], [0], [0]>} : vector<2x16x16xf32>, vector<2x16x32xf32>, vector<2x16x32xf32> -> vector<2x16x32xf32>
    "tpu.trace_stop"() : () -> ()
    %22 = vector.shape_cast %21 : vector<2x16x32xf32> to vector<32x32xf32>
    %c0_9 = arith.constant 0 : index
    %c0_10 = arith.constant 0 : index
    %23 = vector.load %arg7[%c0_9, %c0_10] : memref<32x128xf32, #tpu.memory_space<vmem>>, vector<32x32xf32>
    tpu.vector_store %arg7[%c0_9, %c0_10], %22 {strides = array<i32>} : memref<32x128xf32, #tpu.memory_space<vmem>>, vector<32x32xf32>,
    %24 = vector.extract_strided_slice %6 {offsets = [0, 0, 32], sizes = [2, 16, 32], strides = [1, 1, 1]} : vector<2x16x384xf32> to vector<2x16x32xf32>
    %25 = vector.extract_strided_slice %6 {offsets = [0, 0, 160], sizes = [2, 16, 32], strides = [1, 1, 1]} : vector<2x16x384xf32> to vector<2x16x32xf32>
    %26 = vector.extract_strided_slice %6 {offsets = [0, 0, 288], sizes = [2, 16, 32], strides = [1, 1, 1]} : vector<2x16x384xf32> to vector<2x16x32xf32>
    "tpu.trace_start"() <{level = 10 : i32, message = "bqd,bkd->bqk"}> : () -> ()
    %cst_11 = arith.constant dense<0.000000e+00> : vector<2x16x16xf32>
    %27 = tpu.matmul %24, %25, %cst_11 {dimension_numbers = #tpu.dot_dimension_numbers<[2], [2], [1], [1], [0, 0, 0, 1, 1, 1], [0], [0]>} : vector<2x16x32xf32>, vector<2x16x32xf32>, vector<2x16x16xf32> -> vector<2x16x16xf32>
    "tpu.trace_stop"() : () -> ()
    %cst_12 = arith.constant dense<0xFF800000> : vector<2x16xf32>
    %28 = vector.multi_reduction <maximumf>, %27, %cst_12 [2] : vector<2x16x16xf32> to vector<2x16xf32>
    %29 = vector.shape_cast %28 : vector<2x16xf32> to vector<2x16x1xf32>
    %30 = vector.broadcast %29 : vector<2x16x1xf32> to vector<2x16x16xf32>
    %31 = arith.subf %27, %30 : vector<2x16x16xf32>
    %32 = math.exp %31 : vector<2x16x16xf32>
    %cst_13 = arith.constant dense<0.000000e+00> : vector<2x16xf32>
    %33 = vector.multi_reduction <add>, %32, %cst_13 [2] : vector<2x16x16xf32> to vector<2x16xf32>
    %34 = vector.shape_cast %33 : vector<2x16xf32> to vector<2x16x1xf32>
    %35 = tpu.reciprocal %34 : vector<2x16x1xf32> -> vector<2x16x1xf32>
    %36 = vector.broadcast %35 : vector<2x16x1xf32> to vector<2x16x16xf32>
    %37 = arith.mulf %32, %36 : vector<2x16x16xf32>
    "tpu.trace_start"() <{level = 10 : i32, message = "bqk,bkd->bqd"}> : () -> ()
    %cst_14 = arith.constant dense<0.000000e+00> : vector<2x16x32xf32>
    %38 = tpu.matmul %37, %26, %cst_14 {dimension_numbers = #tpu.dot_dimension_numbers<[2], [1], [1], [2], [0, 0, 0, 1, 1, 2], [0], [0]>} : vector<2x16x16xf32>, vector<2x16x32xf32>, vector<2x16x32xf32> -> vector<2x16x32xf32>
    "tpu.trace_stop"() : () -> ()
    %39 = vector.shape_cast %38 : vector<2x16x32xf32> to vector<32x32xf32>
    %c0_15 = arith.constant 0 : index
    %c32 = arith.constant 32 : index
    %40 = vector.load %arg7[%c0_15, %c32] : memref<32x128xf32, #tpu.memory_space<vmem>>, vector<32x32xf32>
    tpu.vector_store %arg7[%c0_15, %c32], %39 {strides = array<i32>} : memref<32x128xf32, #tpu.memory_space<vmem>>, vector<32x32xf32>,
    %41 = vector.extract_strided_slice %6 {offsets = [0, 0, 64], sizes = [2, 16, 32], strides = [1, 1, 1]} : vector<2x16x384xf32> to vector<2x16x32xf32>
    %42 = vector.extract_strided_slice %6 {offsets = [0, 0, 192], sizes = [2, 16, 32], strides = [1, 1, 1]} : vector<2x16x384xf32> to vector<2x16x32xf32>
    %43 = vector.extract_strided_slice %6 {offsets = [0, 0, 320], sizes = [2, 16, 32], strides = [1, 1, 1]} : vector<2x16x384xf32> to vector<2x16x32xf32>
    "tpu.trace_start"() <{level = 10 : i32, message = "bqd,bkd->bqk"}> : () -> ()
    %cst_16 = arith.constant dense<0.000000e+00> : vector<2x16x16xf32>
    %44 = tpu.matmul %41, %42, %cst_16 {dimension_numbers = #tpu.dot_dimension_numbers<[2], [2], [1], [1], [0, 0, 0, 1, 1, 1], [0], [0]>} : vector<2x16x32xf32>, vector<2x16x32xf32>, vector<2x16x16xf32> -> vector<2x16x16xf32>
    "tpu.trace_stop"() : () -> ()
    %cst_17 = arith.constant dense<0xFF800000> : vector<2x16xf32>
    %45 = vector.multi_reduction <maximumf>, %44, %cst_17 [2] : vector<2x16x16xf32> to vector<2x16xf32>
    %46 = vector.shape_cast %45 : vector<2x16xf32> to vector<2x16x1xf32>
    %47 = vector.broadcast %46 : vector<2x16x1xf32> to vector<2x16x16xf32>
    %48 = arith.subf %44, %47 : vector<2x16x16xf32>
    %49 = math.exp %48 : vector<2x16x16xf32>
    %cst_18 = arith.constant dense<0.000000e+00> : vector<2x16xf32>
    %50 = vector.multi_reduction <add>, %49, %cst_18 [2] : vector<2x16x16xf32> to vector<2x16xf32>
    %51 = vector.shape_cast %50 : vector<2x16xf32> to vector<2x16x1xf32>
    %52 = tpu.reciprocal %51 : vector<2x16x1xf32> -> vector<2x16x1xf32>
    %53 = vector.broadcast %52 : vector<2x16x1xf32> to vector<2x16x16xf32>
    %54 = arith.mulf %49, %53 : vector<2x16x16xf32>
    "tpu.trace_start"() <{level = 10 : i32, message = "bqk,bkd->bqd"}> : () -> ()
    %cst_19 = arith.constant dense<0.000000e+00> : vector<2x16x32xf32>
    %55 = tpu.matmul %54, %43, %cst_19 {dimension_numbers = #tpu.dot_dimension_numbers<[2], [1], [1], [2], [0, 0, 0, 1, 1, 2], [0], [0]>} : vector<2x16x16xf32>, vector<2x16x32xf32>, vector<2x16x32xf32> -> vector<2x16x32xf32>
    "tpu.trace_stop"() : () -> ()
    %56 = vector.shape_cast %55 : vector<2x16x32xf32> to vector<32x32xf32>
    %c0_20 = arith.constant 0 : index
    %c64 = arith.constant 64 : index
    %57 = vector.load %arg7[%c0_20, %c64] : memref<32x128xf32, #tpu.memory_space<vmem>>, vector<32x32xf32>
    tpu.vector_store %arg7[%c0_20, %c64], %56 {strides = array<i32>} : memref<32x128xf32, #tpu.memory_space<vmem>>, vector<32x32xf32>,
    %58 = vector.extract_strided_slice %6 {offsets = [0, 0, 96], sizes = [2, 16, 32], strides = [1, 1, 1]} : vector<2x16x384xf32> to vector<2x16x32xf32>
    %59 = vector.extract_strided_slice %6 {offsets = [0, 0, 224], sizes = [2, 16, 32], strides = [1, 1, 1]} : vector<2x16x384xf32> to vector<2x16x32xf32>
    %60 = vector.extract_strided_slice %6 {offsets = [0, 0, 352], sizes = [2, 16, 32], strides = [1, 1, 1]} : vector<2x16x384xf32> to vector<2x16x32xf32>
    "tpu.trace_start"() <{level = 10 : i32, message = "bqd,bkd->bqk"}> : () -> ()
    %cst_21 = arith.constant dense<0.000000e+00> : vector<2x16x16xf32>
    %61 = tpu.matmul %58, %59, %cst_21 {dimension_numbers = #tpu.dot_dimension_numbers<[2], [2], [1], [1], [0, 0, 0, 1, 1, 1], [0], [0]>} : vector<2x16x32xf32>, vector<2x16x32xf32>, vector<2x16x16xf32> -> vector<2x16x16xf32>
    "tpu.trace_stop"() : () -> ()
    %cst_22 = arith.constant dense<0xFF800000> : vector<2x16xf32>
    %62 = vector.multi_reduction <maximumf>, %61, %cst_22 [2] : vector<2x16x16xf32> to vector<2x16xf32>
    %63 = vector.shape_cast %62 : vector<2x16xf32> to vector<2x16x1xf32>
    %64 = vector.broadcast %63 : vector<2x16x1xf32> to vector<2x16x16xf32>
    %65 = arith.subf %61, %64 : vector<2x16x16xf32>
    %66 = math.exp %65 : vector<2x16x16xf32>
    %cst_23 = arith.constant dense<0.000000e+00> : vector<2x16xf32>
    %67 = vector.multi_reduction <add>, %66, %cst_23 [2] : vector<2x16x16xf32> to vector<2x16xf32>
    %68 = vector.shape_cast %67 : vector<2x16xf32> to vector<2x16x1xf32>
    %69 = tpu.reciprocal %68 : vector<2x16x1xf32> -> vector<2x16x1xf32>
    %70 = vector.broadcast %69 : vector<2x16x1xf32> to vector<2x16x16xf32>
    %71 = arith.mulf %66, %70 : vector<2x16x16xf32>
    "tpu.trace_start"() <{level = 10 : i32, message = "bqk,bkd->bqd"}> : () -> ()
    %cst_24 = arith.constant dense<0.000000e+00> : vector<2x16x32xf32>
    %72 = tpu.matmul %71, %60, %cst_24 {dimension_numbers = #tpu.dot_dimension_numbers<[2], [1], [1], [2], [0, 0, 0, 1, 1, 2], [0], [0]>} : vector<2x16x16xf32>, vector<2x16x32xf32>, vector<2x16x32xf32> -> vector<2x16x32xf32>
    "tpu.trace_stop"() : () -> ()
    %73 = vector.shape_cast %72 : vector<2x16x32xf32> to vector<32x32xf32>
    %c0_25 = arith.constant 0 : index
    %c96 = arith.constant 96 : index
    %74 = vector.load %arg7[%c0_25, %c96] : memref<32x128xf32, #tpu.memory_space<vmem>>, vector<32x32xf32>
    tpu.vector_store %arg7[%c0_25, %c96], %73 {strides = array<i32>} : memref<32x128xf32, #tpu.memory_space<vmem>>, vector<32x32xf32>,
    %c0_26 = arith.constant 0 : index
    %c0_27 = arith.constant 0 : index
    %75 = vector.load %arg7[%c0_26, %c0_27] : memref<32x128xf32, #tpu.memory_space<vmem>>, vector<32x128xf32>
    %c0_28 = arith.constant 0 : index
    %c0_29 = arith.constant 0 : index
    %76 = vector.load %arg4[%c0_28, %c0_29] : memref<128x128xf32, #tpu.memory_space<vmem>>, vector<128x128xf32>
    %cst_30 = arith.constant dense<0.000000e+00> : vector<32x128xf32>
    %77 = tpu.matmul %75, %76, %cst_30 {dimension_numbers = #tpu.dot_dimension_numbers<[1], [0], [0], [1], [0, 0, 1, 1], [], []>} : vector<32x128xf32>, vector<128x128xf32>, vector<32x128xf32> -> vector<32x128xf32>
    %c0_31 = arith.constant 0 : index
    %c0_32 = arith.constant 0 : index
    %78 = vector.load %arg5[%c0_31, %c0_32] : memref<1x128xf32, #tpu.memory_space<vmem>>, vector<1x128xf32>
    %79 = vector.broadcast %78 : vector<1x128xf32> to vector<32x128xf32>
    %80 = arith.addf %77, %79 : vector<32x128xf32>
    %c0_33 = arith.constant 0 : index
    %c0_34 = arith.constant 0 : index
    %81 = vector.load %arg6[%c0_33, %c0_34] : memref<32x128xf32, #tpu.memory_space<vmem>>, vector<32x128xf32>
    tpu.vector_store %arg6[%c0_33, %c0_34], %80 {strides = array<i32>} : memref<32x128xf32, #tpu.memory_space<vmem>>, vector<32x128xf32>,
    return
  }
  func.func @transform_0(%arg0: i32) -> (i32, i32) {
    %c0_i32 = arith.constant 0 : i32
    %c0_i32_0 = arith.constant 0 : i32
    return %arg0, %c0_i32 : i32, i32
  }
  func.func @transform_1(%arg0: i32) -> (i32, i32) {
    %c0_i32 = arith.constant 0 : i32
    %c0_i32_0 = arith.constant 0 : i32
    %c0_i32_1 = arith.constant 0 : i32
    return %c0_i32, %c0_i32_0 : i32, i32
  }
  func.func @transform_2(%arg0: i32) -> (i32, i32) {
    %c0_i32 = arith.constant 0 : i32
    %c0_i32_0 = arith.constant 0 : i32
    %c0_i32_1 = arith.constant 0 : i32
    return %c0_i32, %c0_i32_0 : i32, i32
  }
  func.func @transform_3(%arg0: i32) -> (i32, i32) {
    %c0_i32 = arith.constant 0 : i32
    %c0_i32_0 = arith.constant 0 : i32
    %c0_i32_1 = arith.constant 0 : i32
    return %c0_i32, %c0_i32_0 : i32, i32
  }
  func.func @transform_4(%arg0: i32) -> (i32, i32) {
    %c0_i32 = arith.constant 0 : i32
    %c0_i32_0 = arith.constant 0 : i32
    %c0_i32_1 = arith.constant 0 : i32
    return %c0_i32, %c0_i32_0 : i32, i32
  }
  func.func @transform_5(%arg0: i32) -> (i32, i32) {
    %c0_i32 = arith.constant 0 : i32
    %c0_i32_0 = arith.constant 0 : i32
    return %arg0, %c0_i32 : i32, i32
  }
}

</mosaic_0001>

<llo_original>
// kernel: tpu_custom_call.1
$region0: #{tpu_custom_call.1}
  #allocation0 [shape = 'u32[]', space=smem, size = 0x4, offset = 0x4, fixed_abs, tag = 'smem constant byte address 0x4 - core index']
  #allocation1 [shape = 'u32[144,128]{1,0:T(1,128)}', space=vmem, size = 0x12000, scoped, tag = 'internal scratch']
  #allocation2 [shape = 'f32[32,128]{1,0:T(8,128)}', space=vmem, size = 0x4000, scoped, tag = 'scratch operand']
  %s0 = inlined_call_operand.hbm [shape: f32[32,128], index: 0, kind: input, shape index: {}]
  %s1 = inlined_call_operand.hbm [shape: f32[128,384], index: 1, kind: input, shape index: {}]
  %s2 = inlined_call_operand.vmem [shape: f32[1,384], index: 2, kind: input, shape index: {}]
  %s3 = inlined_call_operand.hbm [shape: f32[128,128], index: 3, kind: input, shape index: {}]
  %s4 = inlined_call_operand.vmem [shape: f32[1,128], index: 4, kind: input, shape index: {}]
  %s5 = inlined_call_operand.hbm [shape: f32[32,128], index: 5, kind: output, shape index: {}]
  %s6 = sld [smem:[#allocation0]]
  $region42: #{tpu_custom_call.1} parent=0
    _
  %s8 = ssub.s32 1, %s6
  %s9 = scalar_select 0, %s8, %s6
  $region1: #{tpu_custom_call.1} parent=0
    #allocation3 [shape = 'u8[16384]{0}', space=vmem, size = 0x4000, scoped, tag = 'input window, operand 0, single buffered']
    #allocation4 [shape = 's32[1]{0}', space=sflag, size = 0x4, scoped, tag = 'scoped memory for tpu_custom_call.1']
    #allocation5 [shape = 's32[1]{0}', space=sflag, size = 0x4, scoped, tag = 'scoped memory for tpu_custom_call.1']
    #allocation6 [shape = 'u8[196608]{0}', space=vmem, size = 0x30000, scoped, tag = 'input window, operand 1, single buffered']
    #allocation7 [shape = 's32[1]{0}', space=sflag, size = 0x4, scoped, tag = 'scoped memory for tpu_custom_call.1']
    #allocation8 [shape = 'u8[65536]{0}', space=vmem, size = 0x10000, scoped, tag = 'input window, operand 3, single buffered']
    #allocation9 [shape = 'u8[16384]{0}', space=vmem, size = 0x4000, scoped, tag = 'output window, operand 0, single buffered']
    %10 = vsyncpa [#allocation4], 0
    %11 = vsyncpa [#allocation7], 0
    %12 = vsyncpa [#allocation5], 0
    // Predicated region
    $region2: #{tpu_custom_call.1} parent=1 // pred_check
      _
    $region3: #{tpu_custom_call.1} parent=1 // pred_check_branch
      %14 = sbr.rel (0) target = $region5
    $region4: #{tpu_custom_call.1} parent=1 // pred_region
      %s16 = ssub.s32 512, 512
      %17 = vsyncadd [#allocation4], %s16
      %s18 = sshll.u32 [#allocation3], 4
      %s19 = int_to_ptr.vmem [resolvable:$true] %s18
      %24 = dma.hbm_to_vmem [thread:$0]  %s0, 512, %s19, [#allocation4], 128, 128, 8
    $region5: #{tpu_custom_call.1} parent=1 // pred_fallthru
      _
    // Predicated region
    $region6: #{tpu_custom_call.1} parent=1 // pred_check
      _
    $region7: #{tpu_custom_call.1} parent=1 // pred_check_branch
      %26 = sbr.rel (0) target = $region9
    $region8: #{tpu_custom_call.1} parent=1 // pred_region
      %s28 = ssub.s32 6144, 6144
      %29 = vsyncadd [#allocation7], %s28
      %s30 = sshll.u32 [#allocation6], 4
      %s31 = int_to_ptr.vmem [resolvable:$true] %s30
      %36 = dma.hbm_to_vmem [thread:$0]  %s1, 6144, %s31, [#allocation7], 384, 384, 24
    $region9: #{tpu_custom_call.1} parent=1 // pred_fallthru
      _
    // Predicated region
    $region10: #{tpu_custom_call.1} parent=1 // pred_check
      _
    $region11: #{tpu_custom_call.1} parent=1 // pred_check_branch
      %38 = sbr.rel (0) target = $region13
    $region12: #{tpu_custom_call.1} parent=1 // pred_region
      _
    $region13: #{tpu_custom_call.1} parent=1 // pred_fallthru
      _
    // Predicated region
    $region14: #{tpu_custom_call.1} parent=1 // pred_check
      _
    $region15: #{tpu_custom_call.1} parent=1 // pred_check_branch
      %40 = sbr.rel (0) target = $region17
    $region16: #{tpu_custom_call.1} parent=1 // pred_region
      %s42 = ssub.s32 2048, 2048
      %43 = vsyncadd [#allocation7], %s42
      %s44 = sshll.u32 [#allocation8], 4
      %s45 = int_to_ptr.vmem [resolvable:$true] %s44
      %50 = dma.hbm_to_vmem [thread:$0]  %s3, 2048, %s45, [#allocation7], 128, 128, 8
    $region17: #{tpu_custom_call.1} parent=1 // pred_fallthru
      _
    // Predicated region
    $region18: #{tpu_custom_call.1} parent=1 // pred_check
      _
    $region19: #{tpu_custom_call.1} parent=1 // pred_check_branch
      %52 = sbr.rel (0) target = $region21
    $region20: #{tpu_custom_call.1} parent=1 // pred_region
      _
    $region21: #{tpu_custom_call.1} parent=1 // pred_fallthru
      _
    // Predicated region
    $region22: #{tpu_custom_call.1} parent=1 // pred_check
      _
    $region23: #{tpu_custom_call.1} parent=1 // pred_check_branch
      %54 = sbr.rel (0) target = $region25
    $region24: #{tpu_custom_call.1} parent=1 // pred_region
      %55 = dma.done [#allocation4], 512
    $region25: #{tpu_custom_call.1} parent=1 // pred_fallthru
      _
    // Predicated region
    $region26: #{tpu_custom_call.1} parent=1 // pred_check
      _
    $region27: #{tpu_custom_call.1} parent=1 // pred_check_branch
      %57 = sbr.rel (0) target = $region29
    $region28: #{tpu_custom_call.1} parent=1 // pred_region
      %58 = dma.done [#allocation7], 6144
    $region29: #{tpu_custom_call.1} parent=1 // pred_fallthru
      _
    // Predicated region
    $region30: #{tpu_custom_call.1} parent=1 // pred_check
      _
    $region31: #{tpu_custom_call.1} parent=1 // pred_check_branch
      %60 = sbr.rel (0) target = $region33
    $region32: #{tpu_custom_call.1} parent=1 // pred_region
      %61 = dma.done [#allocation7], 2048
    $region33: #{tpu_custom_call.1} parent=1 // pred_fallthru
      _
    %v62 = vld [vmem:[#allocation3] sm:$0xff]
    %v63 = vld [vmem:[#allocation3 + $0x8] sm:$0xff]
    %v64 = vld [vmem:[#allocation3 + $0x10] sm:$0xff]
    %v65 = vld [vmem:[#allocation3 + $0x18] sm:$0xff]
    %v66 = vld [vmem:[#allocation6] sm:$0xff]
    %v67 = vld [vmem:[#allocation6 + $0x8] sm:$0xff]
    %v68 = vld [vmem:[#allocation6 + $0x10] sm:$0xff]
    %v69 = vld [vmem:[#allocation6 + $0x18] sm:$0xff]
    %v70 = vld [vmem:[#allocation6 + $0x20] sm:$0xff]
    %v71 = vld [vmem:[#allocation6 + $0x28] sm:$0xff]
    %v72 = vld [vmem:[#allocation6 + $0x30] sm:$0xff]
    %v73 = vld [vmem:[#allocation6 + $0x38] sm:$0xff]
    %v74 = vld [vmem:[#allocation6 + $0x40] sm:$0xff]
    %v75 = vld [vmem:[#allocation6 + $0x48] sm:$0xff]
    %v76 = vld [vmem:[#allocation6 + $0x50] sm:$0xff]
    %v77 = vld [vmem:[#allocation6 + $0x58] sm:$0xff]
    %v78 = vld [vmem:[#allocation6 + $0x60] sm:$0xff]
    %v79 = vld [vmem:[#allocation6 + $0x68] sm:$0xff]
    %v80 = vld [vmem:[#allocation6 + $0x70] sm:$0xff]
    %v81 = vld [vmem:[#allocation6 + $0x78] sm:$0xff]
    %v82 = vld [vmem:[#allocation6 + $0x80] sm:$0xff]
    %v83 = vld [vmem:[#allocation6 + $0x88] sm:$0xff]
    %v84 = vld [vmem:[#allocation6 + $0x90] sm:$0xff]
    %v85 = vld [vmem:[#allocation6 + $0x98] sm:$0xff]
    %v86 = vld [vmem:[#allocation6 + $0xa0] sm:$0xff]
    %v87 = vld [vmem:[#allocation6 + $0xa8] sm:$0xff]
    %v88 = vld [vmem:[#allocation6 + $0xb0] sm:$0xff]
    %v89 = vld [vmem:[#allocation6 + $0xb8] sm:$0xff]
    %v90 = vld [vmem:[#allocation6 + $0xc0] sm:$0xff]
    %v91 = vld [vmem:[#allocation6 + $0xc8] sm:$0xff]
    %v92 = vld [vmem:[#allocation6 + $0xd0] sm:$0xff]
    %v93 = vld [vmem:[#allocation6 + $0xd8] sm:$0xff]
    %v94 = vld [vmem:[#allocation6 + $0xe0] sm:$0xff]
    %v95 = vld [vmem:[#allocation6 + $0xe8] sm:$0xff]
    %v96 = vld [vmem:[#allocation6 + $0xf0] sm:$0xff]
    %v97 = vld [vmem:[#allocation6 + $0xf8] sm:$0xff]
    %v98 = vld [vmem:[#allocation6 + $0x100] sm:$0xff]
    %v99 = vld [vmem:[#allocation6 + $0x108] sm:$0xff]
    %v100 = vld [vmem:[#allocation6 + $0x110] sm:$0xff]
    %v101 = vld [vmem:[#allocation6 + $0x118] sm:$0xff]
    %v102 = vld [vmem:[#allocation6 + $0x120] sm:$0xff]
    %v103 = vld [vmem:[#allocation6 + $0x128] sm:$0xff]
    %v104 = vld [vmem:[#allocation6 + $0x130] sm:$0xff]
    %v105 = vld [vmem:[#allocation6 + $0x138] sm:$0xff]
    %v106 = vld [vmem:[#allocation6 + $0x140] sm:$0xff]
    %v107 = vld [vmem:[#allocation6 + $0x148] sm:$0xff]
    %v108 = vld [vmem:[#allocation6 + $0x150] sm:$0xff]
    %v109 = vld [vmem:[#allocation6 + $0x158] sm:$0xff]
    %v110 = vld [vmem:[#allocation6 + $0x160] sm:$0xff]
    %v111 = vld [vmem:[#allocation6 + $0x168] sm:$0xff]
    %v112 = vld [vmem:[#allocation6 + $0x170] sm:$0xff]
    %v113 = vld [vmem:[#allocation6 + $0x178] sm:$0xff]
    %v114 = vld [vmem:[%s2] sm:$0x7]
    %v116 = vlaneseq
    %v117 = vshrl.u32 %v116, 7
    %v118 = vsub.s32 0, %v117
    %v119 = vrot.slane %v114, %v118
    %v120 = vlaneseq
    %v121 = vshrl.u32 %v120, 7
    %v122 = vsub.s32 1, %v121
    %v123 = vrot.slane %v114, %v122
    %v124 = vlaneseq
    %v125 = vshrl.u32 %v124, 7
    %v126 = vsub.s32 2, %v125
    %v127 = vrot.slane %v114, %v126
    %131 = vmatprep.subr.mxu0 %v67
    %132 = vmatpush1.msra.mxu0 %v66
    %133 = vmatprep.subr.mxu0 %v70
    %134 = vmatpush1.msra.mxu0 %v69
    %135 = vmatprep.subr.mxu0 %v73
    %136 = vmatpush1.msra.mxu0 %v72
    %137 = vmatprep.subr.mxu0 %v76
    %138 = vmatpush1.msra.mxu0 %v75
    %139 = vmatprep.subr.mxu0 %v79
    %140 = vmatpush1.msra.mxu0 %v78
    %141 = vmatprep.subr.mxu0 %v82
    %142 = vmatpush1.msra.mxu0 %v81
    %143 = vmatprep.subr.mxu0 %v85
    %144 = vmatpush1.msra.mxu0 %v84
    %145 = vmatprep.subr.mxu0 %v88
    %146 = vmatpush1.msra.mxu0 %v87
    %147 = vmatprep.subr.mxu0 %v91
    %148 = vmatpush1.msra.mxu0 %v90
    %149 = vmatprep.subr.mxu0 %v94
    %150 = vmatpush1.msra.mxu0 %v93
    %151 = vmatprep.subr.mxu0 %v97
    %152 = vmatpush1.msra.mxu0 %v96
    %153 = vmatprep.subr.mxu0 %v100
    %154 = vmatpush1.msra.mxu0 %v99
    %155 = vmatprep.subr.mxu0 %v103
    %156 = vmatpush1.msra.mxu0 %v102
    %157 = vmatprep.subr.mxu0 %v106
    %158 = vmatpush1.msra.mxu0 %v105
    %159 = vmatprep.subr.mxu0 %v109
    %160 = vmatpush1.msra.mxu0 %v108
    %161 = vmatprep.subr.mxu0 %v112
    %162 = vmatpush1.msra.mxu0 %v111
    %163 = vmatprep.subr.mxu0 0.0
    %164 = vmatpush1.msra.mxu0 0.0
    %165 = vmatprep.subr.mxu0 0.0
    %166 = vmatpush1.msra.mxu0 0.0
    %167 = vmatprep.subr.mxu0 0.0
    %168 = vmatpush1.msra.mxu0 0.0
    %169 = vmatprep.subr.mxu0 0.0
    %170 = vmatpush1.msra.mxu0 0.0
    %171 = vmatprep.subr.mxu0 0.0
    %172 = vmatpush1.msra.mxu0 0.0
    %173 = vmatprep.subr.mxu0 0.0
    %174 = vmatpush1.msra.mxu0 0.0
    %175 = vmatprep.subr.mxu0 0.0
    %176 = vmatpush1.msra.mxu0 0.0
    %177 = vmatprep.subr.mxu0 0.0
    %178 = vmatpush1.msra.mxu0 0.0
    %179 = vmatprep.subr.mxu0 0.0
    %180 = vmatpush1.msra.mxu0 0.0
    %181 = vmatprep.subr.mxu0 0.0
    %182 = vmatpush1.msra.mxu0 0.0
    %183 = vmatprep.subr.mxu0 0.0
    %184 = vmatpush1.msra.mxu0 0.0
    %185 = vmatprep.subr.mxu0 0.0
    %186 = vmatpush1.msra.mxu0 0.0
    %187 = vmatprep.subr.mxu0 0.0
    %188 = vmatpush1.msra.mxu0 0.0
    %189 = vmatprep.subr.mxu0 0.0
    %190 = vmatpush1.msra.mxu0 0.0
    %191 = vmatprep.subr.mxu0 0.0
    %192 = vmatpush1.msra.mxu0 0.0
    %193 = vmatprep.subr.mxu0 0.0
    %194 = vmatpush1.msra.mxu0 0.0
    %195 = vmatprep.mubr.f32.mxu0 0.0
    %196 = vmatmul.mubr.f32.gmra.mrb[0].mxu0 %v62
    %v197 = vpop.f32.mrb[0].mxu0
    %v198 = vadd.f32 %v119, %v197
    %v199 = vpop.f32.mrb[0].mxu0
    %v200 = vadd.f32 %v123, %v199
    %201 = vmatprep.mubr.f32.mxu0 0.0
    %202 = vmatmul.mubr.f32.gmra.mrb[0].mxu0 %v63
    %v203 = vpop.f32.mrb[0].mxu0
    %v204 = vadd.f32 %v119, %v203
    %v205 = vpop.f32.mrb[0].mxu0
    %v206 = vadd.f32 %v123, %v205
    %207 = vmatprep.mubr.f32.mxu0 0.0
    %208 = vmatmul.mubr.f32.gmra.mrb[0].mxu0 %v64
    %v209 = vpop.f32.mrb[0].mxu0
    %v210 = vadd.f32 %v119, %v209
    %v211 = vpop.f32.mrb[0].mxu0
    %v212 = vadd.f32 %v123, %v211
    %213 = vmatprep.mubr.f32.mxu0 0.0
    %214 = vmatmul.mubr.f32.gmra.mrb[0].mxu0 %v65
    %v215 = vpop.f32.mrb[0].mxu0
    %v216 = vadd.f32 %v119, %v215
    %v217 = vpop.f32.mrb[0].mxu0
    %v218 = vadd.f32 %v123, %v217
    %219 = vdwg.mxu0
    %220 = vmatprep.subr.mxu0 0.0
    %221 = vmatpush1.msra.mxu0 %v68
    %222 = vmatprep.subr.mxu0 0.0
    %223 = vmatpush1.msra.mxu0 %v71
    %224 = vmatprep.subr.mxu0 0.0
    %225 = vmatpush1.msra.mxu0 %v74
    %226 = vmatprep.subr.mxu0 0.0
    %227 = vmatpush1.msra.mxu0 %v77
    %228 = vmatprep.subr.mxu0 0.0
    %229 = vmatpush1.msra.mxu0 %v80
    %230 = vmatprep.subr.mxu0 0.0
    %231 = vmatpush1.msra.mxu0 %v83
    %232 = vmatprep.subr.mxu0 0.0
    %233 = vmatpush1.msra.mxu0 %v86
    %234 = vmatprep.subr.mxu0 0.0
    %235 = vmatpush1.msra.mxu0 %v89
    %236 = vmatprep.subr.mxu0 0.0
    %237 = vmatpush1.msra.mxu0 %v92
    %238 = vmatprep.subr.mxu0 0.0
    %239 = vmatpush1.msra.mxu0 %v95
    %240 = vmatprep.subr.mxu0 0.0
    %241 = vmatpush1.msra.mxu0 %v98
    %242 = vmatprep.subr.mxu0 0.0
    %243 = vmatpush1.msra.mxu0 %v101
    %244 = vmatprep.subr.mxu0 0.0
    %245 = vmatpush1.msra.mxu0 %v104
    %246 = vmatprep.subr.mxu0 0.0
    %247 = vmatpush1.msra.mxu0 %v107
    %248 = vmatprep.subr.mxu0 0.0
    %249 = vmatpush1.msra.mxu0 %v110
    %250 = vmatprep.subr.mxu0 0.0
    %251 = vmatpush1.msra.mxu0 %v113
    %252 = vmatprep.subr.mxu0 0.0
    %253 = vmatpush1.msra.mxu0 0.0
    %254 = vmatprep.subr.mxu0 0.0
    %255 = vmatpush1.msra.mxu0 0.0
    %256 = vmatprep.subr.mxu0 0.0
    %257 = vmatpush1.msra.mxu0 0.0
    %258 = vmatprep.subr.mxu0 0.0
    %259 = vmatpush1.msra.mxu0 0.0
    %260 = vmatprep.subr.mxu0 0.0
    %261 = vmatpush1.msra.mxu0 0.0
    %262 = vmatprep.subr.mxu0 0.0
    %263 = vmatpush1.msra.mxu0 0.0
    %264 = vmatprep.subr.mxu0 0.0
    %265 = vmatpush1.msra.mxu0 0.0
    %266 = vmatprep.subr.mxu0 0.0
    %267 = vmatpush1.msra.mxu0 0.0
    %268 = vmatprep.subr.mxu0 0.0
    %269 = vmatpush1.msra.mxu0 0.0
    %270 = vmatprep.subr.mxu0 0.0
    %271 = vmatpush1.msra.mxu0 0.0
    %272 = vmatprep.subr.mxu0 0.0
    %273 = vmatpush1.msra.mxu0 0.0
    %274 = vmatprep.subr.mxu0 0.0
    %275 = vmatpush1.msra.mxu0 0.0
    %276 = vmatprep.subr.mxu0 0.0
    %277 = vmatpush1.msra.mxu0 0.0
    %278 = vmatprep.subr.mxu0 0.0
    %279 = vmatpush1.msra.mxu0 0.0
    %280 = vmatprep.subr.mxu0 0.0
    %281 = vmatpush1.msra.mxu0 0.0
    %282 = vmatprep.subr.mxu0 0.0
    %283 = vmatpush1.msra.mxu0 0.0
    %284 = vmatprep.mubr.f32.mxu0 0.0
    %285 = vmatmul.mubr.f32.gmra.mrb[0].mxu0 %v62
    %v286 = vpop.f32.mrb[0].mxu0
    %v287 = vadd.f32 %v127, %v286
    %v288 = vpop.f32.mrb[0].mxu0
    %289 = vmatprep.mubr.f32.mxu0 0.0
    %290 = vmatmul.mubr.f32.gmra.mrb[0].mxu0 %v63
    %v291 = vpop.f32.mrb[0].mxu0
    %v292 = vadd.f32 %v127, %v291
    %v293 = vpop.f32.mrb[0].mxu0
    %294 = vmatprep.mubr.f32.mxu0 0.0
    %295 = vmatmul.mubr.f32.gmra.mrb[0].mxu0 %v64
    %v296 = vpop.f32.mrb[0].mxu0
    %v297 = vadd.f32 %v127, %v296
    %v298 = vpop.f32.mrb[0].mxu0
    %299 = vmatprep.mubr.f32.mxu0 0.0
    %300 = vmatmul.mubr.f32.gmra.mrb[0].mxu0 %v65
    %v301 = vpop.f32.mrb[0].mxu0
    %v302 = vadd.f32 %v127, %v301
    %v303 = vpop.f32.mrb[0].mxu0
    %304 = vdwg.mxu0
    %vm305 = vcmask 261120
    %v307 = vsel %vm305, %v198, 0
    %v310 = vsel %vm305, %v204, 0
    %v313 = vsel %vm305, %v200, 0
    %v316 = vsel %vm305, %v206, 0
    %318 = vmatprep.subr.mxu0 0.0
    %319 = vmatpush1.xpose.msra.mxu0 %v313
    %320 = vmatprep.subr.mxu0 0.0
    %321 = vmatpush1.xpose.msra.mxu0 %v316
    %322 = vmatprep.subr.mxu0 0.0
    %323 = vmatpush1.xpose.msra.mxu0 0.0
    %324 = vmatprep.subr.mxu0 0.0
    %325 = vmatpush1.xpose.msra.mxu0 0.0
    %326 = vmatprep.subr.mxu0 0.0
    %327 = vmatpush1.xpose.msra.mxu0 0.0
    %328 = vmatprep.subr.mxu0 0.0
    %329 = vmatpush1.xpose.msra.mxu0 0.0
    %330 = vmatprep.subr.mxu0 0.0
    %331 = vmatpush1.xpose.msra.mxu0 0.0
    %332 = vmatprep.subr.mxu0 0.0
    %333 = vmatpush1.xpose.msra.mxu0 0.0
    %334 = vmatprep.subr.mxu0 0.0
    %335 = vmatpush1.xpose.msra.mxu0 0.0
    %336 = vmatprep.subr.mxu0 0.0
    %337 = vmatpush1.xpose.msra.mxu0 0.0
    %338 = vmatprep.subr.mxu0 0.0
    %339 = vmatpush1.xpose.msra.mxu0 0.0
    %340 = vmatprep.subr.mxu0 0.0
    %341 = vmatpush1.xpose.msra.mxu0 0.0
    %342 = vmatprep.subr.mxu0 0.0
    %343 = vmatpush1.xpose.msra.mxu0 0.0
    %344 = vmatprep.subr.mxu0 0.0
    %345 = vmatpush1.xpose.msra.mxu0 0.0
    %346 = vmatprep.subr.mxu0 0.0
    %347 = vmatpush1.xpose.msra.mxu0 0.0
    %348 = vmatprep.subr.mxu0 0.0
    %349 = vmatpush1.xpose.msra.mxu0 0.0
    %350 = vmatprep.subr.mxu0 0.0
    %351 = vmatpush1.xpose.msra.mxu0 0.0
    %352 = vmatprep.subr.mxu0 0.0
    %353 = vmatpush1.xpose.msra.mxu0 0.0
    %354 = vmatprep.subr.mxu0 0.0
    %355 = vmatpush1.xpose.msra.mxu0 0.0
    %356 = vmatprep.subr.mxu0 0.0
    %357 = vmatpush1.xpose.msra.mxu0 0.0
    %358 = vmatprep.subr.mxu0 0.0
    %359 = vmatpush1.xpose.msra.mxu0 0.0
    %360 = vmatprep.subr.mxu0 0.0
    %361 = vmatpush1.xpose.msra.mxu0 0.0
    %362 = vmatprep.subr.mxu0 0.0
    %363 = vmatpush1.xpose.msra.mxu0 0.0
    %364 = vmatprep.subr.mxu0 0.0
    %365 = vmatpush1.xpose.msra.mxu0 0.0
    %366 = vmatprep.subr.mxu0 0.0
    %367 = vmatpush1.xpose.msra.mxu0 0.0
    %368 = vmatprep.subr.mxu0 0.0
    %369 = vmatpush1.xpose.msra.mxu0 0.0
    %370 = vmatprep.subr.mxu0 0.0
    %371 = vmatpush1.xpose.msra.mxu0 0.0
    %372 = vmatprep.subr.mxu0 0.0
    %373 = vmatpush1.xpose.msra.mxu0 0.0
    %374 = vmatprep.subr.mxu0 0.0
    %375 = vmatpush1.xpose.msra.mxu0 0.0
    %376 = vmatprep.subr.mxu0 0.0
    %377 = vmatpush1.xpose.msra.mxu0 0.0
    %378 = vmatprep.subr.mxu0 0.0
    %379 = vmatpush1.xpose.msra.mxu0 0.0
    %380 = vmatprep.subr.mxu0 0.0
    %381 = vmatpush1.xpose.msra.mxu0 0.0
    %382 = vmatprep.mubr.f32.mxu0 0.0
    %383 = vmatmul.mubr.f32.gmra.mrb[0].mxu0 %v307
    %v384 = vpop.f32.mrb[0].mxu0
    %v385 = vadd.f32 0.0, %v384
    %v386 = vpop.f32.mrb[0].mxu0
    %387 = vmatprep.mubr.f32.mxu0 0.0
    %388 = vmatmul.mubr.f32.gmra.mrb[0].mxu0 %v310
    %v389 = vpop.f32.mrb[0].mxu0
    %v390 = vadd.f32 0.0, %v389
    %v391 = vpop.f32.mrb[0].mxu0
    %392 = vdwg.mxu0
    %v394 = vsel %vm305, %v210, 0
    %v397 = vsel %vm305, %v216, 0
    %v400 = vsel %vm305, %v212, 0
    %v403 = vsel %vm305, %v218, 0
    %405 = vmatprep.subr.mxu0 0.0
    %406 = vmatpush1.xpose.msra.mxu0 %v400
    %407 = vmatprep.subr.mxu0 0.0
    %408 = vmatpush1.xpose.msra.mxu0 %v403
    %409 = vmatprep.subr.mxu0 0.0
    %410 = vmatpush1.xpose.msra.mxu0 0.0
    %411 = vmatprep.subr.mxu0 0.0
    %412 = vmatpush1.xpose.msra.mxu0 0.0
    %413 = vmatprep.subr.mxu0 0.0
    %414 = vmatpush1.xpose.msra.mxu0 0.0
    %415 = vmatprep.subr.mxu0 0.0
    %416 = vmatpush1.xpose.msra.mxu0 0.0
    %417 = vmatprep.subr.mxu0 0.0
    %418 = vmatpush1.xpose.msra.mxu0 0.0
    %419 = vmatprep.subr.mxu0 0.0
    %420 = vmatpush1.xpose.msra.mxu0 0.0
    %421 = vmatprep.subr.mxu0 0.0
    %422 = vmatpush1.xpose.msra.mxu0 0.0
    %423 = vmatprep.subr.mxu0 0.0
    %424 = vmatpush1.xpose.msra.mxu0 0.0
    %425 = vmatprep.subr.mxu0 0.0
    %426 = vmatpush1.xpose.msra.mxu0 0.0
    %427 = vmatprep.subr.mxu0 0.0
    %428 = vmatpush1.xpose.msra.mxu0 0.0
    %429 = vmatprep.subr.mxu0 0.0
    %430 = vmatpush1.xpose.msra.mxu0 0.0
    %431 = vmatprep.subr.mxu0 0.0
    %432 = vmatpush1.xpose.msra.mxu0 0.0
    %433 = vmatprep.subr.mxu0 0.0
    %434 = vmatpush1.xpose.msra.mxu0 0.0
    %435 = vmatprep.subr.mxu0 0.0
    %436 = vmatpush1.xpose.msra.mxu0 0.0
    %437 = vmatprep.subr.mxu0 0.0
    %438 = vmatpush1.xpose.msra.mxu0 0.0
    %439 = vmatprep.subr.mxu0 0.0
    %440 = vmatpush1.xpose.msra.mxu0 0.0
    %441 = vmatprep.subr.mxu0 0.0
    %442 = vmatpush1.xpose.msra.mxu0 0.0
    %443 = vmatprep.subr.mxu0 0.0
    %444 = vmatpush1.xpose.msra.mxu0 0.0
    %445 = vmatprep.subr.mxu0 0.0
    %446 = vmatpush1.xpose.msra.mxu0 0.0
    %447 = vmatprep.subr.mxu0 0.0
    %448 = vmatpush1.xpose.msra.mxu0 0.0
    %449 = vmatprep.subr.mxu0 0.0
    %450 = vmatpush1.xpose.msra.mxu0 0.0
    %451 = vmatprep.subr.mxu0 0.0
    %452 = vmatpush1.xpose.msra.mxu0 0.0
    %453 = vmatprep.subr.mxu0 0.0
    %454 = vmatpush1.xpose.msra.mxu0 0.0
    %455 = vmatprep.subr.mxu0 0.0
    %456 = vmatpush1.xpose.msra.mxu0 0.0
    %457 = vmatprep.subr.mxu0 0.0
    %458 = vmatpush1.xpose.msra.mxu0 0.0
    %459 = vmatprep.subr.mxu0 0.0
    %460 = vmatpush1.xpose.msra.mxu0 0.0
    %461 = vmatprep.subr.mxu0 0.0
    %462 = vmatpush1.xpose.msra.mxu0 0.0
    %463 = vmatprep.subr.mxu0 0.0
    %464 = vmatpush1.xpose.msra.mxu0 0.0
    %465 = vmatprep.subr.mxu0 0.0
    %466 = vmatpush1.xpose.msra.mxu0 0.0
    %467 = vmatprep.subr.mxu0 0.0
    %468 = vmatpush1.xpose.msra.mxu0 0.0
    %469 = vmatprep.mubr.f32.mxu0 0.0
    %470 = vmatmul.mubr.f32.gmra.mrb[0].mxu0 %v394
    %v471 = vpop.f32.mrb[0].mxu0
    %v472 = vadd.f32 0.0, %v471
    %v473 = vpop.f32.mrb[0].mxu0
    %474 = vmatprep.mubr.f32.mxu0 0.0
    %475 = vmatmul.mubr.f32.gmra.mrb[0].mxu0 %v397
    %v476 = vpop.f32.mrb[0].mxu0
    %v477 = vadd.f32 0.0, %v476
    %v478 = vpop.f32.mrb[0].mxu0
    %479 = vdwg.mxu0
    %vm480 = vcmask 130048
    %v481 = vsel %vm480, %v385, -inf
    %482 = vmax.xlane.f32.xlu0 %v481
    %v483 = vpop.xlane.xlu0 %482
    %v484 = vsel %vm480, %v390, -inf
    %485 = vmax.xlane.f32.xlu0 %v484
    %v486 = vpop.xlane.xlu0 %485
    %v487 = vsel %vm480, %v472, -inf
    %488 = vmax.xlane.f32.xlu0 %v487
    %v489 = vpop.xlane.xlu0 %488
    %v490 = vsel %vm480, %v477, -inf
    %491 = vmax.xlane.f32.xlu0 %v490
    %v492 = vpop.xlane.xlu0 %491
    %v493 = vsub.f32 %v385, %v483
    %v494 = vsub.f32 %v390, %v486
    %v495 = vsub.f32 %v472, %v489
    %v496 = vsub.f32 %v477, %v492
    %v497 = vmul.f32 %v493, 1.442695
    %v498 = vpow.pop %v497
    %v499 = vmul.f32 %v494, 1.442695
    %v500 = vpow.pop %v499
    %v501 = vmul.f32 %v495, 1.442695
    %v502 = vpow.pop %v501
    %v503 = vmul.f32 %v496, 1.442695
    %v504 = vpow.pop %v503
    %v505 = vsel %vm480, %v498, 0.0
    %506 = vadd.xlane.f32.xlu0 %v505
    %v507 = vpop.xlane.xlu0 %506
    %v508 = vsel %vm480, %v500, 0.0
    %509 = vadd.xlane.f32.xlu0 %v508
    %v510 = vpop.xlane.xlu0 %509
    %v511 = vsel %vm480, %v502, 0.0
    %512 = vadd.xlane.f32.xlu0 %v511
    %v513 = vpop.xlane.xlu0 %512
    %v514 = vsel %vm480, %v504, 0.0
    %515 = vadd.xlane.f32.xlu0 %v514
    %v516 = vpop.xlane.xlu0 %515
    %v517 = vrcp.pop %v507
    %v518 = vrcp.pop %v510
    %v519 = vrcp.pop %v513
    %v520 = vrcp.pop %v516
    %v521 = vmul.f32 %v498, %v517
    %v522 = vmul.f32 %v500, %v518
    %v523 = vmul.f32 %v502, %v519
    %v524 = vmul.f32 %v504, %v520
    %v526 = vsel %vm480, %v521, 0
    %v529 = vsel %vm480, %v522, 0
    %531 = vmatprep.subr.mxu0 0.0
    %532 = vmatpush1.msra.mxu0 %v287
    %533 = vmatprep.subr.mxu0 0.0
    %534 = vmatpush1.msra.mxu0 %v292
    %535 = vmatprep.subr.mxu0 0.0
    %536 = vmatpush1.msra.mxu0 0.0
    %537 = vmatprep.subr.mxu0 0.0
    %538 = vmatpush1.msra.mxu0 0.0
    %539 = vmatprep.subr.mxu0 0.0
    %540 = vmatpush1.msra.mxu0 0.0
    %541 = vmatprep.subr.mxu0 0.0
    %542 = vmatpush1.msra.mxu0 0.0
    %543 = vmatprep.subr.mxu0 0.0
    %544 = vmatpush1.msra.mxu0 0.0
    %545 = vmatprep.subr.mxu0 0.0
    %546 = vmatpush1.msra.mxu0 0.0
    %547 = vmatprep.subr.mxu0 0.0
    %548 = vmatpush1.msra.mxu0 0.0
    %549 = vmatprep.subr.mxu0 0.0
    %550 = vmatpush1.msra.mxu0 0.0
    %551 = vmatprep.subr.mxu0 0.0
    %552 = vmatpush1.msra.mxu0 0.0
    %553 = vmatprep.subr.mxu0 0.0
    %554 = vmatpush1.msra.mxu0 0.0
    %555 = vmatprep.subr.mxu0 0.0
    %556 = vmatpush1.msra.mxu0 0.0
    %557 = vmatprep.subr.mxu0 0.0
    %558 = vmatpush1.msra.mxu0 0.0
    %559 = vmatprep.subr.mxu0 0.0
    %560 = vmatpush1.msra.mxu0 0.0
    %561 = vmatprep.subr.mxu0 0.0
    %562 = vmatpush1.msra.mxu0 0.0
    %563 = vmatprep.subr.mxu0 0.0
    %564 = vmatpush1.msra.mxu0 0.0
    %565 = vmatprep.subr.mxu0 0.0
    %566 = vmatpush1.msra.mxu0 0.0
    %567 = vmatprep.subr.mxu0 0.0
    %568 = vmatpush1.msra.mxu0 0.0
    %569 = vmatprep.subr.mxu0 0.0
    %570 = vmatpush1.msra.mxu0 0.0
    %571 = vmatprep.subr.mxu0 0.0
    %572 = vmatpush1.msra.mxu0 0.0
    %573 = vmatprep.subr.mxu0 0.0
    %574 = vmatpush1.msra.mxu0 0.0
    %575 = vmatprep.subr.mxu0 0.0
    %576 = vmatpush1.msra.mxu0 0.0
    %577 = vmatprep.subr.mxu0 0.0
    %578 = vmatpush1.msra.mxu0 0.0
    %579 = vmatprep.subr.mxu0 0.0
    %580 = vmatpush1.msra.mxu0 0.0
    %581 = vmatprep.subr.mxu0 0.0
    %582 = vmatpush1.msra.mxu0 0.0
    %583 = vmatprep.subr.mxu0 0.0
    %584 = vmatpush1.msra.mxu0 0.0
    %585 = vmatprep.subr.mxu0 0.0
    %586 = vmatpush1.msra.mxu0 0.0
    %587 = vmatprep.subr.mxu0 0.0
    %588 = vmatpush1.msra.mxu0 0.0
    %589 = vmatprep.subr.mxu0 0.0
    %590 = vmatpush1.msra.mxu0 0.0
    %591 = vmatprep.subr.mxu0 0.0
    %592 = vmatpush1.msra.mxu0 0.0
    %593 = vmatprep.subr.mxu0 0.0
    %594 = vmatpush1.msra.mxu0 0.0
    %595 = vmatprep.mubr.f32.mxu0 0.0
    %596 = vmatmul.mubr.f32.gmra.mrb[0].mxu0 %v526
    %v597 = vpop.f32.mrb[0].mxu0
    %v598 = vadd.f32 0.0, %v597
    %v599 = vpop.f32.mrb[0].mxu0
    %600 = vmatprep.mubr.f32.mxu0 0.0
    %601 = vmatmul.mubr.f32.gmra.mrb[0].mxu0 %v529
    %v602 = vpop.f32.mrb[0].mxu0
    %v603 = vadd.f32 0.0, %v602
    %v604 = vpop.f32.mrb[0].mxu0
    %605 = vdwg.mxu0
    %v607 = vsel %vm480, %v523, 0
    %v610 = vsel %vm480, %v524, 0
    %612 = vmatprep.subr.mxu0 0.0
    %613 = vmatpush1.msra.mxu0 %v297
    %614 = vmatprep.subr.mxu0 0.0
    %615 = vmatpush1.msra.mxu0 %v302
    %616 = vmatprep.subr.mxu0 0.0
    %617 = vmatpush1.msra.mxu0 0.0
    %618 = vmatprep.subr.mxu0 0.0
    %619 = vmatpush1.msra.mxu0 0.0
    %620 = vmatprep.subr.mxu0 0.0
    %621 = vmatpush1.msra.mxu0 0.0
    %622 = vmatprep.subr.mxu0 0.0
    %623 = vmatpush1.msra.mxu0 0.0
    %624 = vmatprep.subr.mxu0 0.0
    %625 = vmatpush1.msra.mxu0 0.0
    %626 = vmatprep.subr.mxu0 0.0
    %627 = vmatpush1.msra.mxu0 0.0
    %628 = vmatprep.subr.mxu0 0.0
    %629 = vmatpush1.msra.mxu0 0.0
    %630 = vmatprep.subr.mxu0 0.0
    %631 = vmatpush1.msra.mxu0 0.0
    %632 = vmatprep.subr.mxu0 0.0
    %633 = vmatpush1.msra.mxu0 0.0
    %634 = vmatprep.subr.mxu0 0.0
    %635 = vmatpush1.msra.mxu0 0.0
    %636 = vmatprep.subr.mxu0 0.0
    %637 = vmatpush1.msra.mxu0 0.0
    %638 = vmatprep.subr.mxu0 0.0
    %639 = vmatpush1.msra.mxu0 0.0
    %640 = vmatprep.subr.mxu0 0.0
    %641 = vmatpush1.msra.mxu0 0.0
    %642 = vmatprep.subr.mxu0 0.0
    %643 = vmatpush1.msra.mxu0 0.0
    %644 = vmatprep.subr.mxu0 0.0
    %645 = vmatpush1.msra.mxu0 0.0
    %646 = vmatprep.subr.mxu0 0.0
    %647 = vmatpush1.msra.mxu0 0.0
    %648 = vmatprep.subr.mxu0 0.0
    %649 = vmatpush1.msra.mxu0 0.0
    %650 = vmatprep.subr.mxu0 0.0
    %651 = vmatpush1.msra.mxu0 0.0
    %652 = vmatprep.subr.mxu0 0.0
    %653 = vmatpush1.msra.mxu0 0.0
    %654 = vmatprep.subr.mxu0 0.0
    %655 = vmatpush1.msra.mxu0 0.0
    %656 = vmatprep.subr.mxu0 0.0
    %657 = vmatpush1.msra.mxu0 0.0
    %658 = vmatprep.subr.mxu0 0.0
    %659 = vmatpush1.msra.mxu0 0.0
    %660 = vmatprep.subr.mxu0 0.0
    %661 = vmatpush1.msra.mxu0 0.0
    %662 = vmatprep.subr.mxu0 0.0
    %663 = vmatpush1.msra.mxu0 0.0
    %664 = vmatprep.subr.mxu0 0.0
    %665 = vmatpush1.msra.mxu0 0.0
    %666 = vmatprep.subr.mxu0 0.0
    %667 = vmatpush1.msra.mxu0 0.0
    %668 = vmatprep.subr.mxu0 0.0
    %669 = vmatpush1.msra.mxu0 0.0
    %670 = vmatprep.subr.mxu0 0.0
    %671 = vmatpush1.msra.mxu0 0.0
    %672 = vmatprep.subr.mxu0 0.0
    %673 = vmatpush1.msra.mxu0 0.0
    %674 = vmatprep.subr.mxu0 0.0
    %675 = vmatpush1.msra.mxu0 0.0
    %676 = vmatprep.mubr.f32.mxu0 0.0
    %677 = vmatmul.mubr.f32.gmra.mrb[0].mxu0 %v607
    %v678 = vpop.f32.mrb[0].mxu0
    %v679 = vadd.f32 0.0, %v678
    %v680 = vpop.f32.mrb[0].mxu0
    %681 = vmatprep.mubr.f32.mxu0 0.0
    %682 = vmatmul.mubr.f32.gmra.mrb[0].mxu0 %v610
    %v683 = vpop.f32.mrb[0].mxu0
    %v684 = vadd.f32 0.0, %v683
    %v685 = vpop.f32.mrb[0].mxu0
    %686 = vdwg.mxu0
    %687 = vst.msk [vmem:[#allocation2] sm:$0xff] %vm305, %v598
    %688 = vst.msk [vmem:[#allocation2 + $0x8] sm:$0xff] %vm305, %v603
    %689 = vst.msk [vmem:[#allocation2 + $0x10] sm:$0xff] %vm305, %v679
    %690 = vst.msk [vmem:[#allocation2 + $0x18] sm:$0xff] %vm305, %v684
    %691 = vrot.lane.b32.xlu0 %v198, 96
    %v692 = vpop.permute.xlu0 %691
    %693 = vrot.lane.b32.xlu0 %v204, 96
    %v694 = vpop.permute.xlu0 %693
    %695 = vrot.lane.b32.xlu0 %v200, 96
    %v696 = vpop.permute.xlu0 %695
    %697 = vrot.lane.b32.xlu0 %v206, 96
    %v698 = vpop.permute.xlu0 %697
    %v699 = vsel %vm305, %v692, 0
    %v701 = vsel %vm305, %v694, 0
    %v703 = vsel %vm305, %v696, 0
    %v705 = vsel %vm305, %v698, 0
    %707 = vmatprep.subr.mxu0 0.0
    %708 = vmatpush1.xpose.msra.mxu0 %v703
    %709 = vmatprep.subr.mxu0 0.0
    %710 = vmatpush1.xpose.msra.mxu0 %v705
    %711 = vmatprep.subr.mxu0 0.0
    %712 = vmatpush1.xpose.msra.mxu0 0.0
    %713 = vmatprep.subr.mxu0 0.0
    %714 = vmatpush1.xpose.msra.mxu0 0.0
    %715 = vmatprep.subr.mxu0 0.0
    %716 = vmatpush1.xpose.msra.mxu0 0.0
    %717 = vmatprep.subr.mxu0 0.0
    %718 = vmatpush1.xpose.msra.mxu0 0.0
    %719 = vmatprep.subr.mxu0 0.0
    %720 = vmatpush1.xpose.msra.mxu0 0.0
    %721 = vmatprep.subr.mxu0 0.0
    %722 = vmatpush1.xpose.msra.mxu0 0.0
    %723 = vmatprep.subr.mxu0 0.0
    %724 = vmatpush1.xpose.msra.mxu0 0.0
    %725 = vmatprep.subr.mxu0 0.0
    %726 = vmatpush1.xpose.msra.mxu0 0.0
    %727 = vmatprep.subr.mxu0 0.0
    %728 = vmatpush1.xpose.msra.mxu0 0.0
    %729 = vmatprep.subr.mxu0 0.0
    %730 = vmatpush1.xpose.msra.mxu0 0.0
    %731 = vmatprep.subr.mxu0 0.0
    %732 = vmatpush1.xpose.msra.mxu0 0.0
    %733 = vmatprep.subr.mxu0 0.0
    %734 = vmatpush1.xpose.msra.mxu0 0.0
    %735 = vmatprep.subr.mxu0 0.0
    %736 = vmatpush1.xpose.msra.mxu0 0.0
    %737 = vmatprep.subr.mxu0 0.0
    %738 = vmatpush1.xpose.msra.mxu0 0.0
    %739 = vmatprep.subr.mxu0 0.0
    %740 = vmatpush1.xpose.msra.mxu0 0.0
    %741 = vmatprep.subr.mxu0 0.0
    %742 = vmatpush1.xpose.msra.mxu0 0.0
    %743 = vmatprep.subr.mxu0 0.0
    %744 = vmatpush1.xpose.msra.mxu0 0.0
    %745 = vmatprep.subr.mxu0 0.0
    %746 = vmatpush1.xpose.msra.mxu0 0.0
    %747 = vmatprep.subr.mxu0 0.0
    %748 = vmatpush1.xpose.msra.mxu0 0.0
    %749 = vmatprep.subr.mxu0 0.0
    %750 = vmatpush1.xpose.msra.mxu0 0.0
    %751 = vmatprep.subr.mxu0 0.0
    %752 = vmatpush1.xpose.msra.mxu0 0.0
    %753 = vmatprep.subr.mxu0 0.0
    %754 = vmatpush1.xpose.msra.mxu0 0.0
    %755 = vmatprep.subr.mxu0 0.0
    %756 = vmatpush1.xpose.msra.mxu0 0.0
    %757 = vmatprep.subr.mxu0 0.0
    %758 = vmatpush1.xpose.msra.mxu0 0.0
    %759 = vmatprep.subr.mxu0 0.0
    %760 = vmatpush1.xpose.msra.mxu0 0.0
    %761 = vmatprep.subr.mxu0 0.0
    %762 = vmatpush1.xpose.msra.mxu0 0.0
    %763 = vmatprep.subr.mxu0 0.0
    %764 = vmatpush1.xpose.msra.mxu0 0.0
    %765 = vmatprep.subr.mxu0 0.0
    %766 = vmatpush1.xpose.msra.mxu0 0.0
    %767 = vmatprep.subr.mxu0 0.0
    %768 = vmatpush1.xpose.msra.mxu0 0.0
    %769 = vmatprep.subr.mxu0 0.0
    %770 = vmatpush1.xpose.msra.mxu0 0.0
    %771 = vmatprep.mubr.f32.mxu0 0.0
    %772 = vmatmul.mubr.f32.gmra.mrb[0].mxu0 %v699
    %v773 = vpop.f32.mrb[0].mxu0
    %v774 = vadd.f32 0.0, %v773
    %v775 = vpop.f32.mrb[0].mxu0
    %776 = vmatprep.mubr.f32.mxu0 0.0
    %777 = vmatmul.mubr.f32.gmra.mrb[0].mxu0 %v701
    %v778 = vpop.f32.mrb[0].mxu0
    %v779 = vadd.f32 0.0, %v778
    %v780 = vpop.f32.mrb[0].mxu0
    %781 = vdwg.mxu0
    %782 = vrot.lane.b32.xlu0 %v210, 96
    %v783 = vpop.permute.xlu0 %782
    %784 = vrot.lane.b32.xlu0 %v216, 96
    %v785 = vpop.permute.xlu0 %784
    %786 = vrot.lane.b32.xlu0 %v212, 96
    %v787 = vpop.permute.xlu0 %786
    %788 = vrot.lane.b32.xlu0 %v218, 96
    %v789 = vpop.permute.xlu0 %788
    %v790 = vsel %vm305, %v783, 0
    %v792 = vsel %vm305, %v785, 0
    %v794 = vsel %vm305, %v787, 0
    %v796 = vsel %vm305, %v789, 0
    %798 = vmatprep.subr.mxu0 0.0
    %799 = vmatpush1.xpose.msra.mxu0 %v794
    %800 = vmatprep.subr.mxu0 0.0
    %801 = vmatpush1.xpose.msra.mxu0 %v796
    %802 = vmatprep.subr.mxu0 0.0
    %803 = vmatpush1.xpose.msra.mxu0 0.0
    %804 = vmatprep.subr.mxu0 0.0
    %805 = vmatpush1.xpose.msra.mxu0 0.0
    %806 = vmatprep.subr.mxu0 0.0
    %807 = vmatpush1.xpose.msra.mxu0 0.0
    %808 = vmatprep.subr.mxu0 0.0
    %809 = vmatpush1.xpose.msra.mxu0 0.0
    %810 = vmatprep.subr.mxu0 0.0
    %811 = vmatpush1.xpose.msra.mxu0 0.0
    %812 = vmatprep.subr.mxu0 0.0
    %813 = vmatpush1.xpose.msra.mxu0 0.0
    %814 = vmatprep.subr.mxu0 0.0
    %815 = vmatpush1.xpose.msra.mxu0 0.0
    %816 = vmatprep.subr.mxu0 0.0
    %817 = vmatpush1.xpose.msra.mxu0 0.0
    %818 = vmatprep.subr.mxu0 0.0
    %819 = vmatpush1.xpose.msra.mxu0 0.0
    %820 = vmatprep.subr.mxu0 0.0
    %821 = vmatpush1.xpose.msra.mxu0 0.0
    %822 = vmatprep.subr.mxu0 0.0
    %823 = vmatpush1.xpose.msra.mxu0 0.0
    %824 = vmatprep.subr.mxu0 0.0
    %825 = vmatpush1.xpose.msra.mxu0 0.0
    %826 = vmatprep.subr.mxu0 0.0
    %827 = vmatpush1.xpose.msra.mxu0 0.0
    %828 = vmatprep.subr.mxu0 0.0
    %829 = vmatpush1.xpose.msra.mxu0 0.0
    %830 = vmatprep.subr.mxu0 0.0
    %831 = vmatpush1.xpose.msra.mxu0 0.0
    %832 = vmatprep.subr.mxu0 0.0
    %833 = vmatpush1.xpose.msra.mxu0 0.0
    %834 = vmatprep.subr.mxu0 0.0
    %835 = vmatpush1.xpose.msra.mxu0 0.0
    %836 = vmatprep.subr.mxu0 0.0
    %837 = vmatpush1.xpose.msra.mxu0 0.0
    %838 = vmatprep.subr.mxu0 0.0
    %839 = vmatpush1.xpose.msra.mxu0 0.0
    %840 = vmatprep.subr.mxu0 0.0
    %841 = vmatpush1.xpose.msra.mxu0 0.0
    %842 = vmatprep.subr.mxu0 0.0
    %843 = vmatpush1.xpose.msra.mxu0 0.0
    %844 = vmatprep.subr.mxu0 0.0
    %845 = vmatpush1.xpose.msra.mxu0 0.0
    %846 = vmatprep.subr.mxu0 0.0
    %847 = vmatpush1.xpose.msra.mxu0 0.0
    %848 = vmatprep.subr.mxu0 0.0
    %849 = vmatpush1.xpose.msra.mxu0 0.0
    %850 = vmatprep.subr.mxu0 0.0
    %851 = vmatpush1.xpose.msra.mxu0 0.0
    %852 = vmatprep.subr.mxu0 0.0
    %853 = vmatpush1.xpose.msra.mxu0 0.0
    %854 = vmatprep.subr.mxu0 0.0
    %855 = vmatpush1.xpose.msra.mxu0 0.0
    %856 = vmatprep.subr.mxu0 0.0
    %857 = vmatpush1.xpose.msra.mxu0 0.0
    %858 = vmatprep.subr.mxu0 0.0
    %859 = vmatpush1.xpose.msra.mxu0 0.0
    %860 = vmatprep.subr.mxu0 0.0
    %861 = vmatpush1.xpose.msra.mxu0 0.0
    %862 = vmatprep.mubr.f32.mxu0 0.0
    %863 = vmatmul.mubr.f32.gmra.mrb[0].mxu0 %v790
    %v864 = vpop.f32.mrb[0].mxu0
    %v865 = vadd.f32 0.0, %v864
    %v866 = vpop.f32.mrb[0].mxu0
    %867 = vmatprep.mubr.f32.mxu0 0.0
    %868 = vmatmul.mubr.f32.gmra.mrb[0].mxu0 %v792
    %v869 = vpop.f32.mrb[0].mxu0
    %v870 = vadd.f32 0.0, %v869
    %v871 = vpop.f32.mrb[0].mxu0
    %872 = vdwg.mxu0
    %v873 = vsel %vm480, %v774, -inf
    %874 = vmax.xlane.f32.xlu0 %v873
    %v875 = vpop.xlane.xlu0 %874
    %v876 = vsel %vm480, %v779, -inf
    %877 = vmax.xlane.f32.xlu0 %v876
    %v878 = vpop.xlane.xlu0 %877
    %v879 = vsel %vm480, %v865, -inf
    %880 = vmax.xlane.f32.xlu0 %v879
    %v881 = vpop.xlane.xlu0 %880
    %v882 = vsel %vm480, %v870, -inf
    %883 = vmax.xlane.f32.xlu0 %v882
    %v884 = vpop.xlane.xlu0 %883
    %v885 = vsub.f32 %v774, %v875
    %v886 = vsub.f32 %v779, %v878
    %v887 = vsub.f32 %v865, %v881
    %v888 = vsub.f32 %v870, %v884
    %v889 = vmul.f32 %v885, 1.442695
    %v890 = vpow.pop %v889
    %v891 = vmul.f32 %v886, 1.442695
    %v892 = vpow.pop %v891
    %v893 = vmul.f32 %v887, 1.442695
    %v894 = vpow.pop %v893
    %v895 = vmul.f32 %v888, 1.442695
    %v896 = vpow.pop %v895
    %v897 = vsel %vm480, %v890, 0.0
    %898 = vadd.xlane.f32.xlu0 %v897
    %v899 = vpop.xlane.xlu0 %898
    %v900 = vsel %vm480, %v892, 0.0
    %901 = vadd.xlane.f32.xlu0 %v900
    %v902 = vpop.xlane.xlu0 %901
    %v903 = vsel %vm480, %v894, 0.0
    %904 = vadd.xlane.f32.xlu0 %v903
    %v905 = vpop.xlane.xlu0 %904
    %v906 = vsel %vm480, %v896, 0.0
    %907 = vadd.xlane.f32.xlu0 %v906
    %v908 = vpop.xlane.xlu0 %907
    %v909 = vrcp.pop %v899
    %v910 = vrcp.pop %v902
    %v911 = vrcp.pop %v905
    %v912 = vrcp.pop %v908
    %v913 = vmul.f32 %v890, %v909
    %v914 = vmul.f32 %v892, %v910
    %v915 = vmul.f32 %v894, %v911
    %v916 = vmul.f32 %v896, %v912
    %919 = vrot.lane.b32.xlu0 %v287, 96
    %v920 = vpop.permute.xlu0 %919
    %921 = vrot.lane.b32.xlu0 %v292, 96
    %v922 = vpop.permute.xlu0 %921
    %v926 = vsel %vm480, %v913, 0
    %v929 = vsel %vm480, %v914, 0
    %931 = vmatprep.subr.mxu0 0.0
    %932 = vmatpush1.msra.mxu0 %v920
    %933 = vmatprep.subr.mxu0 0.0
    %934 = vmatpush1.msra.mxu0 %v922
    %935 = vmatprep.subr.mxu0 0.0
    %936 = vmatpush1.msra.mxu0 0.0
    %937 = vmatprep.subr.mxu0 0.0
    %938 = vmatpush1.msra.mxu0 0.0
    %939 = vmatprep.subr.mxu0 0.0
    %940 = vmatpush1.msra.mxu0 0.0
    %941 = vmatprep.subr.mxu0 0.0
    %942 = vmatpush1.msra.mxu0 0.0
    %943 = vmatprep.subr.mxu0 0.0
    %944 = vmatpush1.msra.mxu0 0.0
    %945 = vmatprep.subr.mxu0 0.0
    %946 = vmatpush1.msra.mxu0 0.0
    %947 = vmatprep.subr.mxu0 0.0
    %948 = vmatpush1.msra.mxu0 0.0
    %949 = vmatprep.subr.mxu0 0.0
    %950 = vmatpush1.msra.mxu0 0.0
    %951 = vmatprep.subr.mxu0 0.0
    %952 = vmatpush1.msra.mxu0 0.0
    %953 = vmatprep.subr.mxu0 0.0
    %954 = vmatpush1.msra.mxu0 0.0
    %955 = vmatprep.subr.mxu0 0.0
    %956 = vmatpush1.msra.mxu0 0.0
    %957 = vmatprep.subr.mxu0 0.0
    %958 = vmatpush1.msra.mxu0 0.0
    %959 = vmatprep.subr.mxu0 0.0
    %960 = vmatpush1.msra.mxu0 0.0
    %961 = vmatprep.subr.mxu0 0.0
    %962 = vmatpush1.msra.mxu0 0.0
    %963 = vmatprep.subr.mxu0 0.0
    %964 = vmatpush1.msra.mxu0 0.0
    %965 = vmatprep.subr.mxu0 0.0
    %966 = vmatpush1.msra.mxu0 0.0
    %967 = vmatprep.subr.mxu0 0.0
    %968 = vmatpush1.msra.mxu0 0.0
    %969 = vmatprep.subr.mxu0 0.0
    %970 = vmatpush1.msra.mxu0 0.0
    %971 = vmatprep.subr.mxu0 0.0
    %972 = vmatpush1.msra.mxu0 0.0
    %973 = vmatprep.subr.mxu0 0.0
    %974 = vmatpush1.msra.mxu0 0.0
    %975 = vmatprep.subr.mxu0 0.0
    %976 = vmatpush1.msra.mxu0 0.0
    %977 = vmatprep.subr.mxu0 0.0
    %978 = vmatpush1.msra.mxu0 0.0
    %979 = vmatprep.subr.mxu0 0.0
    %980 = vmatpush1.msra.mxu0 0.0
    %981 = vmatprep.subr.mxu0 0.0
    %982 = vmatpush1.msra.mxu0 0.0
    %983 = vmatprep.subr.mxu0 0.0
    %984 = vmatpush1.msra.mxu0 0.0
    %985 = vmatprep.subr.mxu0 0.0
    %986 = vmatpush1.msra.mxu0 0.0
    %987 = vmatprep.subr.mxu0 0.0
    %988 = vmatpush1.msra.mxu0 0.0
    %989 = vmatprep.subr.mxu0 0.0
    %990 = vmatpush1.msra.mxu0 0.0
    %991 = vmatprep.subr.mxu0 0.0
    %992 = vmatpush1.msra.mxu0 0.0
    %993 = vmatprep.subr.mxu0 0.0
    %994 = vmatpush1.msra.mxu0 0.0
    %995 = vmatprep.mubr.f32.mxu0 0.0
    %996 = vmatmul.mubr.f32.gmra.mrb[0].mxu0 %v926
    %v997 = vpop.f32.mrb[0].mxu0
    %v998 = vadd.f32 0.0, %v997
    %v999 = vpop.f32.mrb[0].mxu0
    %1000 = vmatprep.mubr.f32.mxu0 0.0
    %1001 = vmatmul.mubr.f32.gmra.mrb[0].mxu0 %v929
    %v1002 = vpop.f32.mrb[0].mxu0
    %v1003 = vadd.f32 0.0, %v1002
    %v1004 = vpop.f32.mrb[0].mxu0
    %1005 = vdwg.mxu0
    %1008 = vrot.lane.b32.xlu0 %v297, 96
    %v1009 = vpop.permute.xlu0 %1008
    %1010 = vrot.lane.b32.xlu0 %v302, 96
    %v1011 = vpop.permute.xlu0 %1010
    %v1015 = vsel %vm480, %v915, 0
    %v1018 = vsel %vm480, %v916, 0
    %1020 = vmatprep.subr.mxu0 0.0
    %1021 = vmatpush1.msra.mxu0 %v1009
    %1022 = vmatprep.subr.mxu0 0.0
    %1023 = vmatpush1.msra.mxu0 %v1011
    %1024 = vmatprep.subr.mxu0 0.0
    %1025 = vmatpush1.msra.mxu0 0.0
    %1026 = vmatprep.subr.mxu0 0.0
    %1027 = vmatpush1.msra.mxu0 0.0
    %1028 = vmatprep.subr.mxu0 0.0
    %1029 = vmatpush1.msra.mxu0 0.0
    %1030 = vmatprep.subr.mxu0 0.0
    %1031 = vmatpush1.msra.mxu0 0.0
    %1032 = vmatprep.subr.mxu0 0.0
    %1033 = vmatpush1.msra.mxu0 0.0
    %1034 = vmatprep.subr.mxu0 0.0
    %1035 = vmatpush1.msra.mxu0 0.0
    %1036 = vmatprep.subr.mxu0 0.0
    %1037 = vmatpush1.msra.mxu0 0.0
    %1038 = vmatprep.subr.mxu0 0.0
    %1039 = vmatpush1.msra.mxu0 0.0
    %1040 = vmatprep.subr.mxu0 0.0
    %1041 = vmatpush1.msra.mxu0 0.0
    %1042 = vmatprep.subr.mxu0 0.0
    %1043 = vmatpush1.msra.mxu0 0.0
    %1044 = vmatprep.subr.mxu0 0.0
    %1045 = vmatpush1.msra.mxu0 0.0
    %1046 = vmatprep.subr.mxu0 0.0
    %1047 = vmatpush1.msra.mxu0 0.0
    %1048 = vmatprep.subr.mxu0 0.0
    %1049 = vmatpush1.msra.mxu0 0.0
    %1050 = vmatprep.subr.mxu0 0.0
    %1051 = vmatpush1.msra.mxu0 0.0
    %1052 = vmatprep.subr.mxu0 0.0
    %1053 = vmatpush1.msra.mxu0 0.0
    %1054 = vmatprep.subr.mxu0 0.0
    %1055 = vmatpush1.msra.mxu0 0.0
    %1056 = vmatprep.subr.mxu0 0.0
    %1057 = vmatpush1.msra.mxu0 0.0
    %1058 = vmatprep.subr.mxu0 0.0
    %1059 = vmatpush1.msra.mxu0 0.0
    %1060 = vmatprep.subr.mxu0 0.0
    %1061 = vmatpush1.msra.mxu0 0.0
    %1062 = vmatprep.subr.mxu0 0.0
    %1063 = vmatpush1.msra.mxu0 0.0
    %1064 = vmatprep.subr.mxu0 0.0
    %1065 = vmatpush1.msra.mxu0 0.0
    %1066 = vmatprep.subr.mxu0 0.0
    %1067 = vmatpush1.msra.mxu0 0.0
    %1068 = vmatprep.subr.mxu0 0.0
    %1069 = vmatpush1.msra.mxu0 0.0
    %1070 = vmatprep.subr.mxu0 0.0
    %1071 = vmatpush1.msra.mxu0 0.0
    %1072 = vmatprep.subr.mxu0 0.0
    %1073 = vmatpush1.msra.mxu0 0.0
    %1074 = vmatprep.subr.mxu0 0.0
    %1075 = vmatpush1.msra.mxu0 0.0
    %1076 = vmatprep.subr.mxu0 0.0
    %1077 = vmatpush1.msra.mxu0 0.0
    %1078 = vmatprep.subr.mxu0 0.0
    %1079 = vmatpush1.msra.mxu0 0.0
    %1080 = vmatprep.subr.mxu0 0.0
    %1081 = vmatpush1.msra.mxu0 0.0
    %1082 = vmatprep.subr.mxu0 0.0
    %1083 = vmatpush1.msra.mxu0 0.0
    %1084 = vmatprep.mubr.f32.mxu0 0.0
    %1085 = vmatmul.mubr.f32.gmra.mrb[0].mxu0 %v1015
    %v1086 = vpop.f32.mrb[0].mxu0
    %v1087 = vadd.f32 0.0, %v1086
    %v1088 = vpop.f32.mrb[0].mxu0
    %1089 = vmatprep.mubr.f32.mxu0 0.0
    %1090 = vmatmul.mubr.f32.gmra.mrb[0].mxu0 %v1018
    %v1091 = vpop.f32.mrb[0].mxu0
    %v1092 = vadd.f32 0.0, %v1091
    %v1093 = vpop.f32.mrb[0].mxu0
    %1094 = vdwg.mxu0
    %1099 = vrot.lane.b32.xlu0 %v998, 32
    %v1100 = vpop.permute.xlu0 %1099
    %1101 = vrot.lane.b32.xlu0 %v1003, 32
    %v1102 = vpop.permute.xlu0 %1101
    %1103 = vrot.lane.b32.xlu0 %v1087, 32
    %v1104 = vpop.permute.xlu0 %1103
    %1105 = vrot.lane.b32.xlu0 %v1092, 32
    %v1106 = vpop.permute.xlu0 %1105
    %vm1111 = vcmask 523520
    %1112 = vst.msk [vmem:[#allocation2] sm:$0xff] %vm1111, %v1100
    %1113 = vst.msk [vmem:[#allocation2 + $0x8] sm:$0xff] %vm1111, %v1102
    %1114 = vst.msk [vmem:[#allocation2 + $0x10] sm:$0xff] %vm1111, %v1104
    %1115 = vst.msk [vmem:[#allocation2 + $0x18] sm:$0xff] %vm1111, %v1106
    %1116 = vrot.lane.b32.xlu0 %v198, 64
    %v1117 = vpop.permute.xlu0 %1116
    %1118 = vrot.lane.b32.xlu0 %v204, 64
    %v1119 = vpop.permute.xlu0 %1118
    %1120 = vrot.lane.b32.xlu0 %v200, 64
    %v1121 = vpop.permute.xlu0 %1120
    %1122 = vrot.lane.b32.xlu0 %v206, 64
    %v1123 = vpop.permute.xlu0 %1122
    %v1124 = vsel %vm305, %v1117, 0
    %v1126 = vsel %vm305, %v1119, 0
    %v1128 = vsel %vm305, %v1121, 0
    %v1130 = vsel %vm305, %v1123, 0
    %1132 = vmatprep.subr.mxu0 0.0
    %1133 = vmatpush1.xpose.msra.mxu0 %v1128
    %1134 = vmatprep.subr.mxu0 0.0
    %1135 = vmatpush1.xpose.msra.mxu0 %v1130
    %1136 = vmatprep.subr.mxu0 0.0
    %1137 = vmatpush1.xpose.msra.mxu0 0.0
    %1138 = vmatprep.subr.mxu0 0.0
    %1139 = vmatpush1.xpose.msra.mxu0 0.0
    %1140 = vmatprep.subr.mxu0 0.0
    %1141 = vmatpush1.xpose.msra.mxu0 0.0
    %1142 = vmatprep.subr.mxu0 0.0
    %1143 = vmatpush1.xpose.msra.mxu0 0.0
    %1144 = vmatprep.subr.mxu0 0.0
    %1145 = vmatpush1.xpose.msra.mxu0 0.0
    %1146 = vmatprep.subr.mxu0 0.0
    %1147 = vmatpush1.xpose.msra.mxu0 0.0
    %1148 = vmatprep.subr.mxu0 0.0
    %1149 = vmatpush1.xpose.msra.mxu0 0.0
    %1150 = vmatprep.subr.mxu0 0.0
    %1151 = vmatpush1.xpose.msra.mxu0 0.0
    %1152 = vmatprep.subr.mxu0 0.0
    %1153 = vmatpush1.xpose.msra.mxu0 0.0
    %1154 = vmatprep.subr.mxu0 0.0
    %1155 = vmatpush1.xpose.msra.mxu0 0.0
    %1156 = vmatprep.subr.mxu0 0.0
    %1157 = vmatpush1.xpose.msra.mxu0 0.0
    %1158 = vmatprep.subr.mxu0 0.0
    %1159 = vmatpush1.xpose.msra.mxu0 0.0
    %1160 = vmatprep.subr.mxu0 0.0
    %1161 = vmatpush1.xpose.msra.mxu0 0.0
    %1162 = vmatprep.subr.mxu0 0.0
    %1163 = vmatpush1.xpose.msra.mxu0 0.0
    %1164 = vmatprep.subr.mxu0 0.0
    %1165 = vmatpush1.xpose.msra.mxu0 0.0
    %1166 = vmatprep.subr.mxu0 0.0
    %1167 = vmatpush1.xpose.msra.mxu0 0.0
    %1168 = vmatprep.subr.mxu0 0.0
    %1169 = vmatpush1.xpose.msra.mxu0 0.0
    %1170 = vmatprep.subr.mxu0 0.0
    %1171 = vmatpush1.xpose.msra.mxu0 0.0
    %1172 = vmatprep.subr.mxu0 0.0
    %1173 = vmatpush1.xpose.msra.mxu0 0.0
    %1174 = vmatprep.subr.mxu0 0.0
    %1175 = vmatpush1.xpose.msra.mxu0 0.0
    %1176 = vmatprep.subr.mxu0 0.0
    %1177 = vmatpush1.xpose.msra.mxu0 0.0
    %1178 = vmatprep.subr.mxu0 0.0
    %1179 = vmatpush1.xpose.msra.mxu0 0.0
    %1180 = vmatprep.subr.mxu0 0.0
    %1181 = vmatpush1.xpose.msra.mxu0 0.0
    %1182 = vmatprep.subr.mxu0 0.0
    %1183 = vmatpush1.xpose.msra.mxu0 0.0
    %1184 = vmatprep.subr.mxu0 0.0
    %1185 = vmatpush1.xpose.msra.mxu0 0.0
    %1186 = vmatprep.subr.mxu0 0.0
    %1187 = vmatpush1.xpose.msra.mxu0 0.0
    %1188 = vmatprep.subr.mxu0 0.0
    %1189 = vmatpush1.xpose.msra.mxu0 0.0
    %1190 = vmatprep.subr.mxu0 0.0
    %1191 = vmatpush1.xpose.msra.mxu0 0.0
    %1192 = vmatprep.subr.mxu0 0.0
    %1193 = vmatpush1.xpose.msra.mxu0 0.0
    %1194 = vmatprep.subr.mxu0 0.0
    %1195 = vmatpush1.xpose.msra.mxu0 0.0
    %1196 = vmatprep.mubr.f32.mxu0 0.0
    %1197 = vmatmul.mubr.f32.gmra.mrb[0].mxu0 %v1124
    %v1198 = vpop.f32.mrb[0].mxu0
    %v1199 = vadd.f32 0.0, %v1198
    %v1200 = vpop.f32.mrb[0].mxu0
    %1201 = vmatprep.mubr.f32.mxu0 0.0
    %1202 = vmatmul.mubr.f32.gmra.mrb[0].mxu0 %v1126
    %v1203 = vpop.f32.mrb[0].mxu0
    %v1204 = vadd.f32 0.0, %v1203
    %v1205 = vpop.f32.mrb[0].mxu0
    %1206 = vdwg.mxu0
    %1207 = vrot.lane.b32.xlu0 %v210, 64
    %v1208 = vpop.permute.xlu0 %1207
    %1209 = vrot.lane.b32.xlu0 %v216, 64
    %v1210 = vpop.permute.xlu0 %1209
    %1211 = vrot.lane.b32.xlu0 %v212, 64
    %v1212 = vpop.permute.xlu0 %1211
    %1213 = vrot.lane.b32.xlu0 %v218, 64
    %v1214 = vpop.permute.xlu0 %1213
    %v1215 = vsel %vm305, %v1208, 0
    %v1217 = vsel %vm305, %v1210, 0
    %v1219 = vsel %vm305, %v1212, 0
    %v1221 = vsel %vm305, %v1214, 0
    %1223 = vmatprep.subr.mxu0 0.0
    %1224 = vmatpush1.xpose.msra.mxu0 %v1219
    %1225 = vmatprep.subr.mxu0 0.0
    %1226 = vmatpush1.xpose.msra.mxu0 %v1221
    %1227 = vmatprep.subr.mxu0 0.0
    %1228 = vmatpush1.xpose.msra.mxu0 0.0
    %1229 = vmatprep.subr.mxu0 0.0
    %1230 = vmatpush1.xpose.msra.mxu0 0.0
    %1231 = vmatprep.subr.mxu0 0.0
    %1232 = vmatpush1.xpose.msra.mxu0 0.0
    %1233 = vmatprep.subr.mxu0 0.0
    %1234 = vmatpush1.xpose.msra.mxu0 0.0
    %1235 = vmatprep.subr.mxu0 0.0
    %1236 = vmatpush1.xpose.msra.mxu0 0.0
    %1237 = vmatprep.subr.mxu0 0.0
    %1238 = vmatpush1.xpose.msra.mxu0 0.0
    %1239 = vmatprep.subr.mxu0 0.0
    %1240 = vmatpush1.xpose.msra.mxu0 0.0
    %1241 = vmatprep.subr.mxu0 0.0
    %1242 = vmatpush1.xpose.msra.mxu0 0.0
    %1243 = vmatprep.subr.mxu0 0.0
    %1244 = vmatpush1.xpose.msra.mxu0 0.0
    %1245 = vmatprep.subr.mxu0 0.0
    %1246 = vmatpush1.xpose.msra.mxu0 0.0
    %1247 = vmatprep.subr.mxu0 0.0
    %1248 = vmatpush1.xpose.msra.mxu0 0.0
    %1249 = vmatprep.subr.mxu0 0.0
    %1250 = vmatpush1.xpose.msra.mxu0 0.0
    %1251 = vmatprep.subr.mxu0 0.0
    %1252 = vmatpush1.xpose.msra.mxu0 0.0
    %1253 = vmatprep.subr.mxu0 0.0
    %1254 = vmatpush1.xpose.msra.mxu0 0.0
    %1255 = vmatprep.subr.mxu0 0.0
    %1256 = vmatpush1.xpose.msra.mxu0 0.0
    %1257 = vmatprep.subr.mxu0 0.0
    %1258 = vmatpush1.xpose.msra.mxu0 0.0
    %1259 = vmatprep.subr.mxu0 0.0
    %1260 = vmatpush1.xpose.msra.mxu0 0.0
    %1261 = vmatprep.subr.mxu0 0.0
    %1262 = vmatpush1.xpose.msra.mxu0 0.0
    %1263 = vmatprep.subr.mxu0 0.0
    %1264 = vmatpush1.xpose.msra.mxu0 0.0
    %1265 = vmatprep.subr.mxu0 0.0
    %1266 = vmatpush1.xpose.msra.mxu0 0.0
    %1267 = vmatprep.subr.mxu0 0.0
    %1268 = vmatpush1.xpose.msra.mxu0 0.0
    %1269 = vmatprep.subr.mxu0 0.0
    %1270 = vmatpush1.xpose.msra.mxu0 0.0
    %1271 = vmatprep.subr.mxu0 0.0
    %1272 = vmatpush1.xpose.msra.mxu0 0.0
    %1273 = vmatprep.subr.mxu0 0.0
    %1274 = vmatpush1.xpose.msra.mxu0 0.0
    %1275 = vmatprep.subr.mxu0 0.0
    %1276 = vmatpush1.xpose.msra.mxu0 0.0
    %1277 = vmatprep.subr.mxu0 0.0
    %1278 = vmatpush1.xpose.msra.mxu0 0.0
    %1279 = vmatprep.subr.mxu0 0.0
    %1280 = vmatpush1.xpose.msra.mxu0 0.0
    %1281 = vmatprep.subr.mxu0 0.0
    %1282 = vmatpush1.xpose.msra.mxu0 0.0
    %1283 = vmatprep.subr.mxu0 0.0
    %1284 = vmatpush1.xpose.msra.mxu0 0.0
    %1285 = vmatprep.subr.mxu0 0.0
    %1286 = vmatpush1.xpose.msra.mxu0 0.0
    %1287 = vmatprep.mubr.f32.mxu0 0.0
    %1288 = vmatmul.mubr.f32.gmra.mrb[0].mxu0 %v1215
    %v1289 = vpop.f32.mrb[0].mxu0
    %v1290 = vadd.f32 0.0, %v1289
    %v1291 = vpop.f32.mrb[0].mxu0
    %1292 = vmatprep.mubr.f32.mxu0 0.0
    %1293 = vmatmul.mubr.f32.gmra.mrb[0].mxu0 %v1217
    %v1294 = vpop.f32.mrb[0].mxu0
    %v1295 = vadd.f32 0.0, %v1294
    %v1296 = vpop.f32.mrb[0].mxu0
    %1297 = vdwg.mxu0
    %v1298 = vsel %vm480, %v1199, -inf
    %1299 = vmax.xlane.f32.xlu0 %v1298
    %v1300 = vpop.xlane.xlu0 %1299
    %v1301 = vsel %vm480, %v1204, -inf
    %1302 = vmax.xlane.f32.xlu0 %v1301
    %v1303 = vpop.xlane.xlu0 %1302
    %v1304 = vsel %vm480, %v1290, -inf
    %1305 = vmax.xlane.f32.xlu0 %v1304
    %v1306 = vpop.xlane.xlu0 %1305
    %v1307 = vsel %vm480, %v1295, -inf
    %1308 = vmax.xlane.f32.xlu0 %v1307
    %v1309 = vpop.xlane.xlu0 %1308
    %v1310 = vsub.f32 %v1199, %v1300
    %v1311 = vsub.f32 %v1204, %v1303
    %v1312 = vsub.f32 %v1290, %v1306
    %v1313 = vsub.f32 %v1295, %v1309
    %v1314 = vmul.f32 %v1310, 1.442695
    %v1315 = vpow.pop %v1314
    %v1316 = vmul.f32 %v1311, 1.442695
    %v1317 = vpow.pop %v1316
    %v1318 = vmul.f32 %v1312, 1.442695
    %v1319 = vpow.pop %v1318
    %v1320 = vmul.f32 %v1313, 1.442695
    %v1321 = vpow.pop %v1320
    %v1322 = vsel %vm480, %v1315, 0.0
    %1323 = vadd.xlane.f32.xlu0 %v1322
    %v1324 = vpop.xlane.xlu0 %1323
    %v1325 = vsel %vm480, %v1317, 0.0
    %1326 = vadd.xlane.f32.xlu0 %v1325
    %v1327 = vpop.xlane.xlu0 %1326
    %v1328 = vsel %vm480, %v1319, 0.0
    %1329 = vadd.xlane.f32.xlu0 %v1328
    %v1330 = vpop.xlane.xlu0 %1329
    %v1331 = vsel %vm480, %v1321, 0.0
    %1332 = vadd.xlane.f32.xlu0 %v1331
    %v1333 = vpop.xlane.xlu0 %1332
    %v1334 = vrcp.pop %v1324
    %v1335 = vrcp.pop %v1327
    %v1336 = vrcp.pop %v1330
    %v1337 = vrcp.pop %v1333
    %v1338 = vmul.f32 %v1315, %v1334
    %v1339 = vmul.f32 %v1317, %v1335
    %v1340 = vmul.f32 %v1319, %v1336
    %v1341 = vmul.f32 %v1321, %v1337
    %1342 = vrot.lane.b32.xlu0 %v287, 64
    %v1343 = vpop.permute.xlu0 %1342
    %1344 = vrot.lane.b32.xlu0 %v292, 64
    %v1345 = vpop.permute.xlu0 %1344
    %v1349 = vsel %vm480, %v1338, 0
    %v1352 = vsel %vm480, %v1339, 0
    %1354 = vmatprep.subr.mxu0 0.0
    %1355 = vmatpush1.msra.mxu0 %v1343
    %1356 = vmatprep.subr.mxu0 0.0
    %1357 = vmatpush1.msra.mxu0 %v1345
    %1358 = vmatprep.subr.mxu0 0.0
    %1359 = vmatpush1.msra.mxu0 0.0
    %1360 = vmatprep.subr.mxu0 0.0
    %1361 = vmatpush1.msra.mxu0 0.0
    %1362 = vmatprep.subr.mxu0 0.0
    %1363 = vmatpush1.msra.mxu0 0.0
    %1364 = vmatprep.subr.mxu0 0.0
    %1365 = vmatpush1.msra.mxu0 0.0
    %1366 = vmatprep.subr.mxu0 0.0
    %1367 = vmatpush1.msra.mxu0 0.0
    %1368 = vmatprep.subr.mxu0 0.0
    %1369 = vmatpush1.msra.mxu0 0.0
    %1370 = vmatprep.subr.mxu0 0.0
    %1371 = vmatpush1.msra.mxu0 0.0
    %1372 = vmatprep.subr.mxu0 0.0
    %1373 = vmatpush1.msra.mxu0 0.0
    %1374 = vmatprep.subr.mxu0 0.0
    %1375 = vmatpush1.msra.mxu0 0.0
    %1376 = vmatprep.subr.mxu0 0.0
    %1377 = vmatpush1.msra.mxu0 0.0
    %1378 = vmatprep.subr.mxu0 0.0
    %1379 = vmatpush1.msra.mxu0 0.0
    %1380 = vmatprep.subr.mxu0 0.0
    %1381 = vmatpush1.msra.mxu0 0.0
    %1382 = vmatprep.subr.mxu0 0.0
    %1383 = vmatpush1.msra.mxu0 0.0
    %1384 = vmatprep.subr.mxu0 0.0
    %1385 = vmatpush1.msra.mxu0 0.0
    %1386 = vmatprep.subr.mxu0 0.0
    %1387 = vmatpush1.msra.mxu0 0.0
    %1388 = vmatprep.subr.mxu0 0.0
    %1389 = vmatpush1.msra.mxu0 0.0
    %1390 = vmatprep.subr.mxu0 0.0
    %1391 = vmatpush1.msra.mxu0 0.0
    %1392 = vmatprep.subr.mxu0 0.0
    %1393 = vmatpush1.msra.mxu0 0.0
    %1394 = vmatprep.subr.mxu0 0.0
    %1395 = vmatpush1.msra.mxu0 0.0
    %1396 = vmatprep.subr.mxu0 0.0
    %1397 = vmatpush1.msra.mxu0 0.0
    %1398 = vmatprep.subr.mxu0 0.0
    %1399 = vmatpush1.msra.mxu0 0.0
    %1400 = vmatprep.subr.mxu0 0.0
    %1401 = vmatpush1.msra.mxu0 0.0
    %1402 = vmatprep.subr.mxu0 0.0
    %1403 = vmatpush1.msra.mxu0 0.0
    %1404 = vmatprep.subr.mxu0 0.0
    %1405 = vmatpush1.msra.mxu0 0.0
    %1406 = vmatprep.subr.mxu0 0.0
    %1407 = vmatpush1.msra.mxu0 0.0
    %1408 = vmatprep.subr.mxu0 0.0
    %1409 = vmatpush1.msra.mxu0 0.0
    %1410 = vmatprep.subr.mxu0 0.0
    %1411 = vmatpush1.msra.mxu0 0.0
    %1412 = vmatprep.subr.mxu0 0.0
    %1413 = vmatpush1.msra.mxu0 0.0
    %1414 = vmatprep.subr.mxu0 0.0
    %1415 = vmatpush1.msra.mxu0 0.0
    %1416 = vmatprep.subr.mxu0 0.0
    %1417 = vmatpush1.msra.mxu0 0.0
    %1418 = vmatprep.mubr.f32.mxu0 0.0
    %1419 = vmatmul.mubr.f32.gmra.mrb[0].mxu0 %v1349
    %v1420 = vpop.f32.mrb[0].mxu0
    %v1421 = vadd.f32 0.0, %v1420
    %v1422 = vpop.f32.mrb[0].mxu0
    %1423 = vmatprep.mubr.f32.mxu0 0.0
    %1424 = vmatmul.mubr.f32.gmra.mrb[0].mxu0 %v1352
    %v1425 = vpop.f32.mrb[0].mxu0
    %v1426 = vadd.f32 0.0, %v1425
    %v1427 = vpop.f32.mrb[0].mxu0
    %1428 = vdwg.mxu0
    %1429 = vrot.lane.b32.xlu0 %v297, 64
    %v1430 = vpop.permute.xlu0 %1429
    %1431 = vrot.lane.b32.xlu0 %v302, 64
    %v1432 = vpop.permute.xlu0 %1431
    %v1436 = vsel %vm480, %v1340, 0
    %v1439 = vsel %vm480, %v1341, 0
    %1441 = vmatprep.subr.mxu0 0.0
    %1442 = vmatpush1.msra.mxu0 %v1430
    %1443 = vmatprep.subr.mxu0 0.0
    %1444 = vmatpush1.msra.mxu0 %v1432
    %1445 = vmatprep.subr.mxu0 0.0
    %1446 = vmatpush1.msra.mxu0 0.0
    %1447 = vmatprep.subr.mxu0 0.0
    %1448 = vmatpush1.msra.mxu0 0.0
    %1449 = vmatprep.subr.mxu0 0.0
    %1450 = vmatpush1.msra.mxu0 0.0
    %1451 = vmatprep.subr.mxu0 0.0
    %1452 = vmatpush1.msra.mxu0 0.0
    %1453 = vmatprep.subr.mxu0 0.0
    %1454 = vmatpush1.msra.mxu0 0.0
    %1455 = vmatprep.subr.mxu0 0.0
    %1456 = vmatpush1.msra.mxu0 0.0
    %1457 = vmatprep.subr.mxu0 0.0
    %1458 = vmatpush1.msra.mxu0 0.0
    %1459 = vmatprep.subr.mxu0 0.0
    %1460 = vmatpush1.msra.mxu0 0.0
    %1461 = vmatprep.subr.mxu0 0.0
    %1462 = vmatpush1.msra.mxu0 0.0
    %1463 = vmatprep.subr.mxu0 0.0
    %1464 = vmatpush1.msra.mxu0 0.0
    %1465 = vmatprep.subr.mxu0 0.0
    %1466 = vmatpush1.msra.mxu0 0.0
    %1467 = vmatprep.subr.mxu0 0.0
    %1468 = vmatpush1.msra.mxu0 0.0
    %1469 = vmatprep.subr.mxu0 0.0
    %1470 = vmatpush1.msra.mxu0 0.0
    %1471 = vmatprep.subr.mxu0 0.0
    %1472 = vmatpush1.msra.mxu0 0.0
    %1473 = vmatprep.subr.mxu0 0.0
    %1474 = vmatpush1.msra.mxu0 0.0
    %1475 = vmatprep.subr.mxu0 0.0
    %1476 = vmatpush1.msra.mxu0 0.0
    %1477 = vmatprep.subr.mxu0 0.0
    %1478 = vmatpush1.msra.mxu0 0.0
    %1479 = vmatprep.subr.mxu0 0.0
    %1480 = vmatpush1.msra.mxu0 0.0
    %1481 = vmatprep.subr.mxu0 0.0
    %1482 = vmatpush1.msra.mxu0 0.0
    %1483 = vmatprep.subr.mxu0 0.0
    %1484 = vmatpush1.msra.mxu0 0.0
    %1485 = vmatprep.subr.mxu0 0.0
    %1486 = vmatpush1.msra.mxu0 0.0
    %1487 = vmatprep.subr.mxu0 0.0
    %1488 = vmatpush1.msra.mxu0 0.0
    %1489 = vmatprep.subr.mxu0 0.0
    %1490 = vmatpush1.msra.mxu0 0.0
    %1491 = vmatprep.subr.mxu0 0.0
    %1492 = vmatpush1.msra.mxu0 0.0
    %1493 = vmatprep.subr.mxu0 0.0
    %1494 = vmatpush1.msra.mxu0 0.0
    %1495 = vmatprep.subr.mxu0 0.0
    %1496 = vmatpush1.msra.mxu0 0.0
    %1497 = vmatprep.subr.mxu0 0.0
    %1498 = vmatpush1.msra.mxu0 0.0
    %1499 = vmatprep.subr.mxu0 0.0
    %1500 = vmatpush1.msra.mxu0 0.0
    %1501 = vmatprep.subr.mxu0 0.0
    %1502 = vmatpush1.msra.mxu0 0.0
    %1503 = vmatprep.subr.mxu0 0.0
    %1504 = vmatpush1.msra.mxu0 0.0
    %1505 = vmatprep.mubr.f32.mxu0 0.0
    %1506 = vmatmul.mubr.f32.gmra.mrb[0].mxu0 %v1436
    %v1507 = vpop.f32.mrb[0].mxu0
    %v1508 = vadd.f32 0.0, %v1507
    %v1509 = vpop.f32.mrb[0].mxu0
    %1510 = vmatprep.mubr.f32.mxu0 0.0
    %1511 = vmatmul.mubr.f32.gmra.mrb[0].mxu0 %v1439
    %v1512 = vpop.f32.mrb[0].mxu0
    %v1513 = vadd.f32 0.0, %v1512
    %v1514 = vpop.f32.mrb[0].mxu0
    %1515 = vdwg.mxu0
    %1520 = vrot.lane.b32.xlu0 %v1421, 64
    %v1521 = vpop.permute.xlu0 %1520
    %1522 = vrot.lane.b32.xlu0 %v1426, 64
    %v1523 = vpop.permute.xlu0 %1522
    %1524 = vrot.lane.b32.xlu0 %v1508, 64
    %v1525 = vpop.permute.xlu0 %1524
    %1526 = vrot.lane.b32.xlu0 %v1513, 64
    %v1527 = vpop.permute.xlu0 %1526
    %vm1532 = vcmask 785920
    %1533 = vst.msk [vmem:[#allocation2] sm:$0xff] %vm1532, %v1521
    %1534 = vst.msk [vmem:[#allocation2 + $0x8] sm:$0xff] %vm1532, %v1523
    %1535 = vst.msk [vmem:[#allocation2 + $0x10] sm:$0xff] %vm1532, %v1525
    %1536 = vst.msk [vmem:[#allocation2 + $0x18] sm:$0xff] %vm1532, %v1527
    %1537 = vrot.lane.b32.xlu0 %v198, 32
    %v1538 = vpop.permute.xlu0 %1537
    %1539 = vrot.lane.b32.xlu0 %v204, 32
    %v1540 = vpop.permute.xlu0 %1539
    %1541 = vrot.lane.b32.xlu0 %v200, 32
    %v1542 = vpop.permute.xlu0 %1541
    %1543 = vrot.lane.b32.xlu0 %v206, 32
    %v1544 = vpop.permute.xlu0 %1543
    %v1545 = vsel %vm305, %v1538, 0
    %v1547 = vsel %vm305, %v1540, 0
    %v1549 = vsel %vm305, %v1542, 0
    %v1551 = vsel %vm305, %v1544, 0
    %1553 = vmatprep.subr.mxu0 0.0
    %1554 = vmatpush1.xpose.msra.mxu0 %v1549
    %1555 = vmatprep.subr.mxu0 0.0
    %1556 = vmatpush1.xpose.msra.mxu0 %v1551
    %1557 = vmatprep.subr.mxu0 0.0
    %1558 = vmatpush1.xpose.msra.mxu0 0.0
    %1559 = vmatprep.subr.mxu0 0.0
    %1560 = vmatpush1.xpose.msra.mxu0 0.0
    %1561 = vmatprep.subr.mxu0 0.0
    %1562 = vmatpush1.xpose.msra.mxu0 0.0
    %1563 = vmatprep.subr.mxu0 0.0
    %1564 = vmatpush1.xpose.msra.mxu0 0.0
    %1565 = vmatprep.subr.mxu0 0.0
    %1566 = vmatpush1.xpose.msra.mxu0 0.0
    %1567 = vmatprep.subr.mxu0 0.0
    %1568 = vmatpush1.xpose.msra.mxu0 0.0
    %1569 = vmatprep.subr.mxu0 0.0
    %1570 = vmatpush1.xpose.msra.mxu0 0.0
    %1571 = vmatprep.subr.mxu0 0.0
    %1572 = vmatpush1.xpose.msra.mxu0 0.0
    %1573 = vmatprep.subr.mxu0 0.0
    %1574 = vmatpush1.xpose.msra.mxu0 0.0
    %1575 = vmatprep.subr.mxu0 0.0
    %1576 = vmatpush1.xpose.msra.mxu0 0.0
    %1577 = vmatprep.subr.mxu0 0.0
    %1578 = vmatpush1.xpose.msra.mxu0 0.0
    %1579 = vmatprep.subr.mxu0 0.0
    %1580 = vmatpush1.xpose.msra.mxu0 0.0
    %1581 = vmatprep.subr.mxu0 0.0
    %1582 = vmatpush1.xpose.msra.mxu0 0.0
    %1583 = vmatprep.subr.mxu0 0.0
    %1584 = vmatpush1.xpose.msra.mxu0 0.0
    %1585 = vmatprep.subr.mxu0 0.0
    %1586 = vmatpush1.xpose.msra.mxu0 0.0
    %1587 = vmatprep.subr.mxu0 0.0
    %1588 = vmatpush1.xpose.msra.mxu0 0.0
    %1589 = vmatprep.subr.mxu0 0.0
    %1590 = vmatpush1.xpose.msra.mxu0 0.0
    %1591 = vmatprep.subr.mxu0 0.0
    %1592 = vmatpush1.xpose.msra.mxu0 0.0
    %1593 = vmatprep.subr.mxu0 0.0
    %1594 = vmatpush1.xpose.msra.mxu0 0.0
    %1595 = vmatprep.subr.mxu0 0.0
    %1596 = vmatpush1.xpose.msra.mxu0 0.0
    %1597 = vmatprep.subr.mxu0 0.0
    %1598 = vmatpush1.xpose.msra.mxu0 0.0
    %1599 = vmatprep.subr.mxu0 0.0
    %1600 = vmatpush1.xpose.msra.mxu0 0.0
    %1601 = vmatprep.subr.mxu0 0.0
    %1602 = vmatpush1.xpose.msra.mxu0 0.0
    %1603 = vmatprep.subr.mxu0 0.0
    %1604 = vmatpush1.xpose.msra.mxu0 0.0
    %1605 = vmatprep.subr.mxu0 0.0
    %1606 = vmatpush1.xpose.msra.mxu0 0.0
    %1607 = vmatprep.subr.mxu0 0.0
    %1608 = vmatpush1.xpose.msra.mxu0 0.0
    %1609 = vmatprep.subr.mxu0 0.0
    %1610 = vmatpush1.xpose.msra.mxu0 0.0
    %1611 = vmatprep.subr.mxu0 0.0
    %1612 = vmatpush1.xpose.msra.mxu0 0.0
    %1613 = vmatprep.subr.mxu0 0.0
    %1614 = vmatpush1.xpose.msra.mxu0 0.0
    %1615 = vmatprep.subr.mxu0 0.0
    %1616 = vmatpush1.xpose.msra.mxu0 0.0
    %1617 = vmatprep.mubr.f32.mxu0 0.0
    %1618 = vmatmul.mubr.f32.gmra.mrb[0].mxu0 %v1545
    %v1619 = vpop.f32.mrb[0].mxu0
    %v1620 = vadd.f32 0.0, %v1619
    %v1621 = vpop.f32.mrb[0].mxu0
    %1622 = vmatprep.mubr.f32.mxu0 0.0
    %1623 = vmatmul.mubr.f32.gmra.mrb[0].mxu0 %v1547
    %v1624 = vpop.f32.mrb[0].mxu0
    %v1625 = vadd.f32 0.0, %v1624
    %v1626 = vpop.f32.mrb[0].mxu0
    %1627 = vdwg.mxu0
    %1628 = vrot.lane.b32.xlu0 %v210, 32
    %v1629 = vpop.permute.xlu0 %1628
    %1630 = vrot.lane.b32.xlu0 %v216, 32
    %v1631 = vpop.permute.xlu0 %1630
    %1632 = vrot.lane.b32.xlu0 %v212, 32
    %v1633 = vpop.permute.xlu0 %1632
    %1634 = vrot.lane.b32.xlu0 %v218, 32
    %v1635 = vpop.permute.xlu0 %1634
    %v1636 = vsel %vm305, %v1629, 0
    %v1638 = vsel %vm305, %v1631, 0
    %v1640 = vsel %vm305, %v1633, 0
    %v1642 = vsel %vm305, %v1635, 0
    %1644 = vmatprep.subr.mxu0 0.0
    %1645 = vmatpush1.xpose.msra.mxu0 %v1640
    %1646 = vmatprep.subr.mxu0 0.0
    %1647 = vmatpush1.xpose.msra.mxu0 %v1642
    %1648 = vmatprep.subr.mxu0 0.0
    %1649 = vmatpush1.xpose.msra.mxu0 0.0
    %1650 = vmatprep.subr.mxu0 0.0
    %1651 = vmatpush1.xpose.msra.mxu0 0.0
    %1652 = vmatprep.subr.mxu0 0.0
    %1653 = vmatpush1.xpose.msra.mxu0 0.0
    %1654 = vmatprep.subr.mxu0 0.0
    %1655 = vmatpush1.xpose.msra.mxu0 0.0
    %1656 = vmatprep.subr.mxu0 0.0
    %1657 = vmatpush1.xpose.msra.mxu0 0.0
    %1658 = vmatprep.subr.mxu0 0.0
    %1659 = vmatpush1.xpose.msra.mxu0 0.0
    %1660 = vmatprep.subr.mxu0 0.0
    %1661 = vmatpush1.xpose.msra.mxu0 0.0
    %1662 = vmatprep.subr.mxu0 0.0
    %1663 = vmatpush1.xpose.msra.mxu0 0.0
    %1664 = vmatprep.subr.mxu0 0.0
    %1665 = vmatpush1.xpose.msra.mxu0 0.0
    %1666 = vmatprep.subr.mxu0 0.0
    %1667 = vmatpush1.xpose.msra.mxu0 0.0
    %1668 = vmatprep.subr.mxu0 0.0
    %1669 = vmatpush1.xpose.msra.mxu0 0.0
    %1670 = vmatprep.subr.mxu0 0.0
    %1671 = vmatpush1.xpose.msra.mxu0 0.0
    %1672 = vmatprep.subr.mxu0 0.0
    %1673 = vmatpush1.xpose.msra.mxu0 0.0
    %1674 = vmatprep.subr.mxu0 0.0
    %1675 = vmatpush1.xpose.msra.mxu0 0.0
    %1676 = vmatprep.subr.mxu0 0.0
    %1677 = vmatpush1.xpose.msra.mxu0 0.0
    %1678 = vmatprep.subr.mxu0 0.0
    %1679 = vmatpush1.xpose.msra.mxu0 0.0
    %1680 = vmatprep.subr.mxu0 0.0
    %1681 = vmatpush1.xpose.msra.mxu0 0.0
    %1682 = vmatprep.subr.mxu0 0.0
    %1683 = vmatpush1.xpose.msra.mxu0 0.0
    %1684 = vmatprep.subr.mxu0 0.0
    %1685 = vmatpush1.xpose.msra.mxu0 0.0
    %1686 = vmatprep.subr.mxu0 0.0
    %1687 = vmatpush1.xpose.msra.mxu0 0.0
    %1688 = vmatprep.subr.mxu0 0.0
    %1689 = vmatpush1.xpose.msra.mxu0 0.0
    %1690 = vmatprep.subr.mxu0 0.0
    %1691 = vmatpush1.xpose.msra.mxu0 0.0
    %1692 = vmatprep.subr.mxu0 0.0
    %1693 = vmatpush1.xpose.msra.mxu0 0.0
    %1694 = vmatprep.subr.mxu0 0.0
    %1695 = vmatpush1.xpose.msra.mxu0 0.0
    %1696 = vmatprep.subr.mxu0 0.0
    %1697 = vmatpush1.xpose.msra.mxu0 0.0
    %1698 = vmatprep.subr.mxu0 0.0
    %1699 = vmatpush1.xpose.msra.mxu0 0.0
    %1700 = vmatprep.subr.mxu0 0.0
    %1701 = vmatpush1.xpose.msra.mxu0 0.0
    %1702 = vmatprep.subr.mxu0 0.0
    %1703 = vmatpush1.xpose.msra.mxu0 0.0
    %1704 = vmatprep.subr.mxu0 0.0
    %1705 = vmatpush1.xpose.msra.mxu0 0.0
    %1706 = vmatprep.subr.mxu0 0.0
    %1707 = vmatpush1.xpose.msra.mxu0 0.0
    %1708 = vmatprep.mubr.f32.mxu0 0.0
    %1709 = vmatmul.mubr.f32.gmra.mrb[0].mxu0 %v1636
    %v1710 = vpop.f32.mrb[0].mxu0
    %v1711 = vadd.f32 0.0, %v1710
    %v1712 = vpop.f32.mrb[0].mxu0
    %1713 = vmatprep.mubr.f32.mxu0 0.0
    %1714 = vmatmul.mubr.f32.gmra.mrb[0].mxu0 %v1638
    %v1715 = vpop.f32.mrb[0].mxu0
    %v1716 = vadd.f32 0.0, %v1715
    %v1717 = vpop.f32.mrb[0].mxu0
    %1718 = vdwg.mxu0
    %v1719 = vsel %vm480, %v1620, -inf
    %1720 = vmax.xlane.f32.xlu0 %v1719
    %v1721 = vpop.xlane.xlu0 %1720
    %v1722 = vsel %vm480, %v1625, -inf
    %1723 = vmax.xlane.f32.xlu0 %v1722
    %v1724 = vpop.xlane.xlu0 %1723
    %v1725 = vsel %vm480, %v1711, -inf
    %1726 = vmax.xlane.f32.xlu0 %v1725
    %v1727 = vpop.xlane.xlu0 %1726
    %v1728 = vsel %vm480, %v1716, -inf
    %1729 = vmax.xlane.f32.xlu0 %v1728
    %v1730 = vpop.xlane.xlu0 %1729
    %v1731 = vsub.f32 %v1620, %v1721
    %v1732 = vsub.f32 %v1625, %v1724
    %v1733 = vsub.f32 %v1711, %v1727
    %v1734 = vsub.f32 %v1716, %v1730
    %v1735 = vmul.f32 %v1731, 1.442695
    %v1736 = vpow.pop %v1735
    %v1737 = vmul.f32 %v1732, 1.442695
    %v1738 = vpow.pop %v1737
    %v1739 = vmul.f32 %v1733, 1.442695
    %v1740 = vpow.pop %v1739
    %v1741 = vmul.f32 %v1734, 1.442695
    %v1742 = vpow.pop %v1741
    %v1743 = vsel %vm480, %v1736, 0.0
    %1744 = vadd.xlane.f32.xlu0 %v1743
    %v1745 = vpop.xlane.xlu0 %1744
    %v1746 = vsel %vm480, %v1738, 0.0
    %1747 = vadd.xlane.f32.xlu0 %v1746
    %v1748 = vpop.xlane.xlu0 %1747
    %v1749 = vsel %vm480, %v1740, 0.0
    %1750 = vadd.xlane.f32.xlu0 %v1749
    %v1751 = vpop.xlane.xlu0 %1750
    %v1752 = vsel %vm480, %v1742, 0.0
    %1753 = vadd.xlane.f32.xlu0 %v1752
    %v1754 = vpop.xlane.xlu0 %1753
    %v1755 = vrcp.pop %v1745
    %v1756 = vrcp.pop %v1748
    %v1757 = vrcp.pop %v1751
    %v1758 = vrcp.pop %v1754
    %v1759 = vmul.f32 %v1736, %v1755
    %v1760 = vmul.f32 %v1738, %v1756
    %v1761 = vmul.f32 %v1740, %v1757
    %v1762 = vmul.f32 %v1742, %v1758
    %1763 = vrot.lane.b32.xlu0 %v287, 32
    %v1764 = vpop.permute.xlu0 %1763
    %1765 = vrot.lane.b32.xlu0 %v292, 32
    %v1766 = vpop.permute.xlu0 %1765
    %v1770 = vsel %vm480, %v1759, 0
    %v1773 = vsel %vm480, %v1760, 0
    %1775 = vmatprep.subr.mxu0 0.0
    %1776 = vmatpush1.msra.mxu0 %v1764
    %1777 = vmatprep.subr.mxu0 0.0
    %1778 = vmatpush1.msra.mxu0 %v1766
    %1779 = vmatprep.subr.mxu0 0.0
    %1780 = vmatpush1.msra.mxu0 0.0
    %1781 = vmatprep.subr.mxu0 0.0
    %1782 = vmatpush1.msra.mxu0 0.0
    %1783 = vmatprep.subr.mxu0 0.0
    %1784 = vmatpush1.msra.mxu0 0.0
    %1785 = vmatprep.subr.mxu0 0.0
    %1786 = vmatpush1.msra.mxu0 0.0
    %1787 = vmatprep.subr.mxu0 0.0
    %1788 = vmatpush1.msra.mxu0 0.0
    %1789 = vmatprep.subr.mxu0 0.0
    %1790 = vmatpush1.msra.mxu0 0.0
    %1791 = vmatprep.subr.mxu0 0.0
    %1792 = vmatpush1.msra.mxu0 0.0
    %1793 = vmatprep.subr.mxu0 0.0
    %1794 = vmatpush1.msra.mxu0 0.0
    %1795 = vmatprep.subr.mxu0 0.0
    %1796 = vmatpush1.msra.mxu0 0.0
    %1797 = vmatprep.subr.mxu0 0.0
    %1798 = vmatpush1.msra.mxu0 0.0
    %1799 = vmatprep.subr.mxu0 0.0
    %1800 = vmatpush1.msra.mxu0 0.0
    %1801 = vmatprep.subr.mxu0 0.0
    %1802 = vmatpush1.msra.mxu0 0.0
    %1803 = vmatprep.subr.mxu0 0.0
    %1804 = vmatpush1.msra.mxu0 0.0
    %1805 = vmatprep.subr.mxu0 0.0
    %1806 = vmatpush1.msra.mxu0 0.0
    %1807 = vmatprep.subr.mxu0 0.0
    %1808 = vmatpush1.msra.mxu0 0.0
    %1809 = vmatprep.subr.mxu0 0.0
    %1810 = vmatpush1.msra.mxu0 0.0
    %1811 = vmatprep.subr.mxu0 0.0
    %1812 = vmatpush1.msra.mxu0 0.0
    %1813 = vmatprep.subr.mxu0 0.0
    %1814 = vmatpush1.msra.mxu0 0.0
    %1815 = vmatprep.subr.mxu0 0.0
    %1816 = vmatpush1.msra.mxu0 0.0
    %1817 = vmatprep.subr.mxu0 0.0
    %1818 = vmatpush1.msra.mxu0 0.0
    %1819 = vmatprep.subr.mxu0 0.0
    %1820 = vmatpush1.msra.mxu0 0.0
    %1821 = vmatprep.subr.mxu0 0.0
    %1822 = vmatpush1.msra.mxu0 0.0
    %1823 = vmatprep.subr.mxu0 0.0
    %1824 = vmatpush1.msra.mxu0 0.0
    %1825 = vmatprep.subr.mxu0 0.0
    %1826 = vmatpush1.msra.mxu0 0.0
    %1827 = vmatprep.subr.mxu0 0.0
    %1828 = vmatpush1.msra.mxu0 0.0
    %1829 = vmatprep.subr.mxu0 0.0
    %1830 = vmatpush1.msra.mxu0 0.0
    %1831 = vmatprep.subr.mxu0 0.0
    %1832 = vmatpush1.msra.mxu0 0.0
    %1833 = vmatprep.subr.mxu0 0.0
    %1834 = vmatpush1.msra.mxu0 0.0
    %1835 = vmatprep.subr.mxu0 0.0
    %1836 = vmatpush1.msra.mxu0 0.0
    %1837 = vmatprep.subr.mxu0 0.0
    %1838 = vmatpush1.msra.mxu0 0.0
    %1839 = vmatprep.mubr.f32.mxu0 0.0
    %1840 = vmatmul.mubr.f32.gmra.mrb[0].mxu0 %v1770
    %v1841 = vpop.f32.mrb[0].mxu0
    %v1842 = vadd.f32 0.0, %v1841
    %v1843 = vpop.f32.mrb[0].mxu0
    %1844 = vmatprep.mubr.f32.mxu0 0.0
    %1845 = vmatmul.mubr.f32.gmra.mrb[0].mxu0 %v1773
    %v1846 = vpop.f32.mrb[0].mxu0
    %v1847 = vadd.f32 0.0, %v1846
    %v1848 = vpop.f32.mrb[0].mxu0
    %1849 = vdwg.mxu0
    %1850 = vrot.lane.b32.xlu0 %v297, 32
    %v1851 = vpop.permute.xlu0 %1850
    %1852 = vrot.lane.b32.xlu0 %v302, 32
    %v1853 = vpop.permute.xlu0 %1852
    %v1857 = vsel %vm480, %v1761, 0
    %v1860 = vsel %vm480, %v1762, 0
    %1862 = vmatprep.subr.mxu0 0.0
    %1863 = vmatpush1.msra.mxu0 %v1851
    %1864 = vmatprep.subr.mxu0 0.0
    %1865 = vmatpush1.msra.mxu0 %v1853
    %1866 = vmatprep.subr.mxu0 0.0
    %1867 = vmatpush1.msra.mxu0 0.0
    %1868 = vmatprep.subr.mxu0 0.0
    %1869 = vmatpush1.msra.mxu0 0.0
    %1870 = vmatprep.subr.mxu0 0.0
    %1871 = vmatpush1.msra.mxu0 0.0
    %1872 = vmatprep.subr.mxu0 0.0
    %1873 = vmatpush1.msra.mxu0 0.0
    %1874 = vmatprep.subr.mxu0 0.0
    %1875 = vmatpush1.msra.mxu0 0.0
    %1876 = vmatprep.subr.mxu0 0.0
    %1877 = vmatpush1.msra.mxu0 0.0
    %1878 = vmatprep.subr.mxu0 0.0
    %1879 = vmatpush1.msra.mxu0 0.0
    %1880 = vmatprep.subr.mxu0 0.0
    %1881 = vmatpush1.msra.mxu0 0.0
    %1882 = vmatprep.subr.mxu0 0.0
    %1883 = vmatpush1.msra.mxu0 0.0
    %1884 = vmatprep.subr.mxu0 0.0
    %1885 = vmatpush1.msra.mxu0 0.0
    %1886 = vmatprep.subr.mxu0 0.0
    %1887 = vmatpush1.msra.mxu0 0.0
    %1888 = vmatprep.subr.mxu0 0.0
    %1889 = vmatpush1.msra.mxu0 0.0
    %1890 = vmatprep.subr.mxu0 0.0
    %1891 = vmatpush1.msra.mxu0 0.0
    %1892 = vmatprep.subr.mxu0 0.0
    %1893 = vmatpush1.msra.mxu0 0.0
    %1894 = vmatprep.subr.mxu0 0.0
    %1895 = vmatpush1.msra.mxu0 0.0
    %1896 = vmatprep.subr.mxu0 0.0
    %1897 = vmatpush1.msra.mxu0 0.0
    %1898 = vmatprep.subr.mxu0 0.0
    %1899 = vmatpush1.msra.mxu0 0.0
    %1900 = vmatprep.subr.mxu0 0.0
    %1901 = vmatpush1.msra.mxu0 0.0
    %1902 = vmatprep.subr.mxu0 0.0
    %1903 = vmatpush1.msra.mxu0 0.0
    %1904 = vmatprep.subr.mxu0 0.0
    %1905 = vmatpush1.msra.mxu0 0.0
    %1906 = vmatprep.subr.mxu0 0.0
    %1907 = vmatpush1.msra.mxu0 0.0
    %1908 = vmatprep.subr.mxu0 0.0
    %1909 = vmatpush1.msra.mxu0 0.0
    %1910 = vmatprep.subr.mxu0 0.0
    %1911 = vmatpush1.msra.mxu0 0.0
    %1912 = vmatprep.subr.mxu0 0.0
    %1913 = vmatpush1.msra.mxu0 0.0
    %1914 = vmatprep.subr.mxu0 0.0
    %1915 = vmatpush1.msra.mxu0 0.0
    %1916 = vmatprep.subr.mxu0 0.0
    %1917 = vmatpush1.msra.mxu0 0.0
    %1918 = vmatprep.subr.mxu0 0.0
    %1919 = vmatpush1.msra.mxu0 0.0
    %1920 = vmatprep.subr.mxu0 0.0
    %1921 = vmatpush1.msra.mxu0 0.0
    %1922 = vmatprep.subr.mxu0 0.0
    %1923 = vmatpush1.msra.mxu0 0.0
    %1924 = vmatprep.subr.mxu0 0.0
    %1925 = vmatpush1.msra.mxu0 0.0
    %1926 = vmatprep.mubr.f32.mxu0 0.0
    %1927 = vmatmul.mubr.f32.gmra.mrb[0].mxu0 %v1857
    %v1928 = vpop.f32.mrb[0].mxu0
    %v1929 = vadd.f32 0.0, %v1928
    %v1930 = vpop.f32.mrb[0].mxu0
    %1931 = vmatprep.mubr.f32.mxu0 0.0
    %1932 = vmatmul.mubr.f32.gmra.mrb[0].mxu0 %v1860
    %v1933 = vpop.f32.mrb[0].mxu0
    %v1934 = vadd.f32 0.0, %v1933
    %v1935 = vpop.f32.mrb[0].mxu0
    %1936 = vdwg.mxu0
    %1941 = vrot.lane.b32.xlu0 %v1842, 96
    %v1942 = vpop.permute.xlu0 %1941
    %1943 = vrot.lane.b32.xlu0 %v1847, 96
    %v1944 = vpop.permute.xlu0 %1943
    %1945 = vrot.lane.b32.xlu0 %v1929, 96
    %v1946 = vpop.permute.xlu0 %1945
    %1947 = vrot.lane.b32.xlu0 %v1934, 96
    %v1948 = vpop.permute.xlu0 %1947
    %vm1953 = vcmask 1048320
    %1954 = vst.msk [vmem:[#allocation2] sm:$0xff] %vm1953, %v1942
    %1955 = vst.msk [vmem:[#allocation2 + $0x8] sm:$0xff] %vm1953, %v1944
    %1956 = vst.msk [vmem:[#allocation2 + $0x10] sm:$0xff] %vm1953, %v1946
    %1957 = vst.msk [vmem:[#allocation2 + $0x18] sm:$0xff] %vm1953, %v1948
    %v1958 = vld [vmem:[#allocation2] sm:$0xff]
    %v1959 = vld [vmem:[#allocation2 + $0x8] sm:$0xff]
    %v1960 = vld [vmem:[#allocation2 + $0x10] sm:$0xff]
    %v1961 = vld [vmem:[#allocation2 + $0x18] sm:$0xff]
    %v1962 = vld [vmem:[#allocation8] sm:$0xff]
    %v1963 = vld [vmem:[#allocation8 + $0x8] sm:$0xff]
    %v1964 = vld [vmem:[#allocation8 + $0x10] sm:$0xff]
    %v1965 = vld [vmem:[#allocation8 + $0x18] sm:$0xff]
    %v1966 = vld [vmem:[#allocation8 + $0x20] sm:$0xff]
    %v1967 = vld [vmem:[#allocation8 + $0x28] sm:$0xff]
    %v1968 = vld [vmem:[#allocation8 + $0x30] sm:$0xff]
    %v1969 = vld [vmem:[#allocation8 + $0x38] sm:$0xff]
    %v1970 = vld [vmem:[#allocation8 + $0x40] sm:$0xff]
    %v1971 = vld [vmem:[#allocation8 + $0x48] sm:$0xff]
    %v1972 = vld [vmem:[#allocation8 + $0x50] sm:$0xff]
    %v1973 = vld [vmem:[#allocation8 + $0x58] sm:$0xff]
    %v1974 = vld [vmem:[#allocation8 + $0x60] sm:$0xff]
    %v1975 = vld [vmem:[#allocation8 + $0x68] sm:$0xff]
    %v1976 = vld [vmem:[#allocation8 + $0x70] sm:$0xff]
    %v1977 = vld [vmem:[#allocation8 + $0x78] sm:$0xff]
    %v1978 = vld [vmem:[%s4] sm:$0x1]
    %v1980 = vlaneseq
    %v1981 = vshrl.u32 %v1980, 7
    %v1982 = vsub.s32 0, %v1981
    %v1983 = vrot.slane %v1978, %v1982
    %1985 = vmatprep.subr.mxu0 0.0
    %1986 = vmatpush1.msra.mxu0 %v1962
    %1987 = vmatprep.subr.mxu0 0.0
    %1988 = vmatpush1.msra.mxu0 %v1963
    %1989 = vmatprep.subr.mxu0 0.0
    %1990 = vmatpush1.msra.mxu0 %v1964
    %1991 = vmatprep.subr.mxu0 0.0
    %1992 = vmatpush1.msra.mxu0 %v1965
    %1993 = vmatprep.subr.mxu0 0.0
    %1994 = vmatpush1.msra.mxu0 %v1966
    %1995 = vmatprep.subr.mxu0 0.0
    %1996 = vmatpush1.msra.mxu0 %v1967
    %1997 = vmatprep.subr.mxu0 0.0
    %1998 = vmatpush1.msra.mxu0 %v1968
    %1999 = vmatprep.subr.mxu0 0.0
    %2000 = vmatpush1.msra.mxu0 %v1969
    %2001 = vmatprep.subr.mxu0 0.0
    %2002 = vmatpush1.msra.mxu0 %v1970
    %2003 = vmatprep.subr.mxu0 0.0
    %2004 = vmatpush1.msra.mxu0 %v1971
    %2005 = vmatprep.subr.mxu0 0.0
    %2006 = vmatpush1.msra.mxu0 %v1972
    %2007 = vmatprep.subr.mxu0 0.0
    %2008 = vmatpush1.msra.mxu0 %v1973
    %2009 = vmatprep.subr.mxu0 0.0
    %2010 = vmatpush1.msra.mxu0 %v1974
    %2011 = vmatprep.subr.mxu0 0.0
    %2012 = vmatpush1.msra.mxu0 %v1975
    %2013 = vmatprep.subr.mxu0 0.0
    %2014 = vmatpush1.msra.mxu0 %v1976
    %2015 = vmatprep.subr.mxu0 0.0
    %2016 = vmatpush1.msra.mxu0 %v1977
    %2017 = vmatprep.subr.mxu0 0.0
    %2018 = vmatpush1.msra.mxu0 0.0
    %2019 = vmatprep.subr.mxu0 0.0
    %2020 = vmatpush1.msra.mxu0 0.0
    %2021 = vmatprep.subr.mxu0 0.0
    %2022 = vmatpush1.msra.mxu0 0.0
    %2023 = vmatprep.subr.mxu0 0.0
    %2024 = vmatpush1.msra.mxu0 0.0
    %2025 = vmatprep.subr.mxu0 0.0
    %2026 = vmatpush1.msra.mxu0 0.0
    %2027 = vmatprep.subr.mxu0 0.0
    %2028 = vmatpush1.msra.mxu0 0.0
    %2029 = vmatprep.subr.mxu0 0.0
    %2030 = vmatpush1.msra.mxu0 0.0
    %2031 = vmatprep.subr.mxu0 0.0
    %2032 = vmatpush1.msra.mxu0 0.0
    %2033 = vmatprep.subr.mxu0 0.0
    %2034 = vmatpush1.msra.mxu0 0.0
    %2035 = vmatprep.subr.mxu0 0.0
    %2036 = vmatpush1.msra.mxu0 0.0
    %2037 = vmatprep.subr.mxu0 0.0
    %2038 = vmatpush1.msra.mxu0 0.0
    %2039 = vmatprep.subr.mxu0 0.0
    %2040 = vmatpush1.msra.mxu0 0.0
    %2041 = vmatprep.subr.mxu0 0.0
    %2042 = vmatpush1.msra.mxu0 0.0
    %2043 = vmatprep.subr.mxu0 0.0
    %2044 = vmatpush1.msra.mxu0 0.0
    %2045 = vmatprep.subr.mxu0 0.0
    %2046 = vmatpush1.msra.mxu0 0.0
    %2047 = vmatprep.subr.mxu0 0.0
    %2048 = vmatpush1.msra.mxu0 0.0
    %2049 = vmatprep.mubr.f32.mxu0 0.0
    %2050 = vmatmul.mubr.f32.gmra.mrb[0].mxu0 %v1958
    %v2051 = vpop.f32.mrb[0].mxu0
    %v2052 = vadd.f32 %v1983, %v2051
    %v2053 = vpop.f32.mrb[0].mxu0
    %2054 = vmatprep.mubr.f32.mxu0 0.0
    %2055 = vmatmul.mubr.f32.gmra.mrb[0].mxu0 %v1959
    %v2056 = vpop.f32.mrb[0].mxu0
    %v2057 = vadd.f32 %v1983, %v2056
    %v2058 = vpop.f32.mrb[0].mxu0
    %2059 = vmatprep.mubr.f32.mxu0 0.0
    %2060 = vmatmul.mubr.f32.gmra.mrb[0].mxu0 %v1960
    %v2061 = vpop.f32.mrb[0].mxu0
    %v2062 = vadd.f32 %v1983, %v2061
    %v2063 = vpop.f32.mrb[0].mxu0
    %2064 = vmatprep.mubr.f32.mxu0 0.0
    %2065 = vmatmul.mubr.f32.gmra.mrb[0].mxu0 %v1961
    %v2066 = vpop.f32.mrb[0].mxu0
    %v2067 = vadd.f32 %v1983, %v2066
    %v2068 = vpop.f32.mrb[0].mxu0
    %2069 = vdwg.mxu0
    %2070 = vst [vmem:[#allocation9] sm:$0xff] %v2052
    %2071 = vst [vmem:[#allocation9 + $0x8] sm:$0xff] %v2057
    %2072 = vst [vmem:[#allocation9 + $0x10] sm:$0xff] %v2062
    %2073 = vst [vmem:[#allocation9 + $0x18] sm:$0xff] %v2067
    // Predicated region
    $region34: #{tpu_custom_call.1} parent=1 // pred_check
      _
    $region35: #{tpu_custom_call.1} parent=1 // pred_check_branch
      %2075 = sbr.rel (0) target = $region37
    $region36: #{tpu_custom_call.1} parent=1 // pred_region
      %s2077 = ssub.s32 512, 512
      %2078 = vsyncadd [#allocation5], %s2077
      %s2079 = sshll.u32 [#allocation9], 4
      %s2080 = int_to_ptr.vmem [resolvable:$true] %s2079
      %2085 = dma.vmem_to_hbm [thread:$0]  %s2080, 512, %s5, [#allocation5], 128, 128, 8
    $region37: #{tpu_custom_call.1} parent=1 // pred_fallthru
      _
    // Predicated region
    $region38: #{tpu_custom_call.1} parent=1 // pred_check
      _
    $region39: #{tpu_custom_call.1} parent=1 // pred_check_branch
      %2087 = sbr.rel (0) target = $region41
    $region40: #{tpu_custom_call.1} parent=1 // pred_region
      %2088 = dma.done [#allocation5], 512
    $region41: #{tpu_custom_call.1} parent=1 // pred_fallthru
      _
    %2089 = vsyncpa [#allocation4], 1
    %2090 = vsyncpa [#allocation7], 1
    %2091 = vsyncpa [#allocation5], 1

</llo_original>
